<compile_context>
chip_gen: v6e
topology: v6e:2x2x1
jax: 0.10.0
libtpu: 0.0.40
codegen_flags: <defaults>
</compile_context>

<pallas_src>
import math

import jax
import jax.numpy as jnp
import numpy as np
from jax.experimental import pallas as pl
from jax.experimental.pallas import tpu as pltpu

DC_SCALE = 0.5  # stand-in for config.DC_SCALE


# ----------------------------------------------------------------------------
# helpers
# ----------------------------------------------------------------------------
def _pick_tile(L, target=1024):
    """Largest lane tile that divides L (multiple of 128 if possible)."""
    if L % 128 != 0:
        return L
    t = min(target, L)
    t -= t % 128
    while L % t:
        t -= 128
    return t


def _residual_weights(index):
    """1 - softmax(arange(1, index+1)), computed host-side (tiny)."""
    a = np.arange(1, index + 1, dtype=np.float32)
    e = np.exp(a - a.max())
    return (1.0 - e / e.sum()).astype(np.float32)


def _shift_lanes(v, off, L):
    """value[:, l] = v[:, l + off] along the last axis, zero outside [0, L)."""
    if off == 0:
        return v
    rows = v.shape[0]
    pad = jnp.zeros((rows, abs(off)), v.dtype)
    if off > 0:
        return jnp.concatenate([v[:, off:], pad], axis=1)
    return jnp.concatenate([pad, v[:, :L + off]], axis=1)


# ----------------------------------------------------------------------------
# kernel 1: GateUnitModule.forward -> scalar prob
# ----------------------------------------------------------------------------
def _gate_prob_kernel(x_ref, w1t_ref, w2t_ref, wc_ref, prob_ref,
                      mx_ref, sum_ref, ch_ref, cmax_ref, cavg_ref):
    phase = pl.program_id(0)
    lt = pl.program_id(1)
    nl = pl.num_programs(1)
    N, C, tL = x_ref.shape
    L = cmax_ref.shape[1]

    # --- phase 0: global adaptive max / avg pooling over L, tile-accumulated ---
    @pl.when(jnp.logical_and(phase == 0, lt == 0))
    def _init_pool():
        mx_ref[...] = jnp.full((N, C), -jnp.inf, jnp.float32)
        sum_ref[...] = jnp.zeros((N, C), jnp.float32)

    @pl.when(phase == 0)
    def _pool_tile():
        x = x_ref[...]
        mx_ref[...] = jnp.maximum(mx_ref[...], jnp.max(x, axis=2))
        sum_ref[...] = sum_ref[...] + jnp.sum(x, axis=2)

    # --- phase 1, first tile: shared 1x1-conv MLP -> channel attention -------
    @pl.when(jnp.logical_and(phase == 1, lt == 0))
    def _channel_attention():
        w1t = w1t_ref[...]
        w2t = w2t_ref[...]

        def mlp(v):  # (N, C) -> (N, C)
            h = jnp.maximum(
                jnp.dot(v, w1t, preferred_element_type=jnp.float32), 0.0)
            return jnp.dot(h, w2t, preferred_element_type=jnp.float32)

        mx = mx_ref[...]
        av = sum_ref[...] * (1.0 / L)
        ch = jax.nn.sigmoid(mlp(mx) + mlp(av))          # (N, C)
        ch_ref[...] = ch[:, :, None]                    # broadcast layout, hoisted

    # --- phase 1, every tile: channel max / mean of gated x -> full-L scratch -
    @pl.when(phase == 1)
    def _spatial_tile():
        xg = x_ref[...] * ch_ref[...]                   # (N, C, tL) * (N, C, 1)
        start = pl.multiple_of(lt * tL, tL)
        cmax_ref[:, pl.ds(start, tL)] = jnp.max(xg, axis=1)
        cavg_ref[:, pl.ds(start, tL)] = jnp.mean(xg, axis=1)

    # --- phase 1, last tile: k=7 spatial conv + sigmoid + global mean --------
    @pl.when(jnp.logical_and(phase == 1, lt == nl - 1))
    def _finalize():
        cmax = cmax_ref[...]                            # (N, L)
        cavg = cavg_ref[...]                            # (N, L)
        acc = jnp.zeros((N, L), jnp.float32)
        # 7-tap correlation (Conv1d(2->1, k=7, pad=3)); runs once per call on the
        # channel-pooled (N, L) buffers, so the shifted-slice cost is negligible.
        for k in range(7):
            off = k - 3
            acc = acc + wc_ref[k] * _shift_lanes(cmax, off, L) \
                      + wc_ref[7 + k] * _shift_lanes(cavg, off, L)
        prob_ref[...] = jnp.reshape(jnp.mean(jax.nn.sigmoid(acc)), (1, 1))


def gate_prob(x, w1t, w2t, wc_flat, tile_l=None):
    """GateUnitModule.forward: returns the scalar proj as a (1, 1) array."""
    N, C, L = x.shape
    Ch = w1t.shape[1]
    tL = _pick_tile(L) if tile_l is None else tile_l
    assert L % tL == 0, "L must be divisible by the lane tile"
    nL = L // tL
    return pl.pallas_call(
        _gate_prob_kernel,
        grid=(2, nL),
        in_specs=[
            pl.BlockSpec((N, C, tL), lambda p, l: (0, 0, l)),   # x, streamed over L
            pl.BlockSpec((C, Ch), lambda p, l: (0, 0)),         # mlp w1^T, resident
            pl.BlockSpec((Ch, C), lambda p, l: (0, 0)),         # mlp w2^T, resident
            pl.BlockSpec(memory_space=pltpu.MemorySpace.SMEM),  # conv taps (14,)
        ],
        out_specs=pl.BlockSpec((1, 1), lambda p, l: (0, 0)),
        out_shape=jax.ShapeDtypeStruct((1, 1), jnp.float32),
        scratch_shapes=[
            pltpu.VMEM((N, C), jnp.float32),      # running max over L
            pltpu.VMEM((N, C), jnp.float32),      # running sum over L
            pltpu.VMEM((N, C, 1), jnp.float32),   # channel attention
            pltpu.VMEM((N, L), jnp.float32),      # channel-max of gated x (full L)
            pltpu.VMEM((N, L), jnp.float32),      # channel-mean of gated x (full L)
        ],
        compiler_params=pltpu.CompilerParams(
            dimension_semantics=("arbitrary", "arbitrary"),
            vmem_limit_bytes=32 * 1024 * 1024,
        ),
    )(x, w1t, w2t, wc_flat)


# ----------------------------------------------------------------------------
# kernel 2: fit_residual (fused weighted residual sum, gated in-place add)
# ----------------------------------------------------------------------------
def _apply_residual_kernel(prob_ref, cfg_ref, rw_ref, x_ref, *rest):
    res_refs = rest[:-1]
    out_ref = rest[-1]
    # cfg = [threshold, scale]; all scalars live in SMEM (no recompile on change).
    add = jnp.where(prob_ref[0] > cfg_ref[0], cfg_ref[1], jnp.float32(0.0))
    acc = rw_ref[0] * res_refs[0][...]
    for i in range(1, len(res_refs)):
        acc = acc + rw_ref[i] * res_refs[i][...]
    out_ref[...] = x_ref[...] + add * acc


def apply_residual(x, prob1, residuals, weights, threshold, scale, tile_l=None):
    N, C, L = x.shape
    tL = _pick_tile(L) if tile_l is None else tile_l
    assert L % tL == 0
    nL = L // tL
    R = len(residuals)
    cfg = jnp.asarray([threshold, scale], jnp.float32)
    rw = jnp.asarray(weights, jnp.float32)
    blk = pl.BlockSpec((N, C, tL), lambda l: (0, 0, l))
    smem = pl.BlockSpec(memory_space=pltpu.MemorySpace.SMEM)
    return pl.pallas_call(
        _apply_residual_kernel,
        grid=(nL,),
        in_specs=[smem, smem, smem, blk] + [blk] * R,
        out_specs=blk,
        out_shape=jax.ShapeDtypeStruct((N, C, L), jnp.float32),
        input_output_aliases={3: 0},     # out aliases x (in-place residual add)
        compiler_params=pltpu.CompilerParams(
            dimension_semantics=("parallel",),
            vmem_limit_bytes=32 * 1024 * 1024,
        ),
    )(prob1, cfg, rw, x, *residuals)


# ----------------------------------------------------------------------------
# module wrapper
# ----------------------------------------------------------------------------
class DRModulePallas:
    """JAX/Pallas port of DRModule (num_layers gate units + residual fitting)."""

    def __init__(self, channels, num_layers, threshold, key, tile_l=None):
        assert channels >= 16, "channels must be >= 16 (channels // 16 bottleneck)"
        self.channels = channels
        self.num_layers = num_layers
        # NOTE: like the PyTorch module, fit_residual gates on the literal 0.5;
        # self.threshold is stored for API parity only.
        self.threshold = threshold
        self.tile_l = tile_l
        self.residual = [0.0 for _ in range(num_layers)]   # init_res()
        hidden = channels // 16
        self.params = []
        for _ in range(num_layers):
            key, k1, k2, k3 = jax.random.split(key, 4)
            w1 = jax.random.normal(k1, (hidden, channels), jnp.float32) \
                 * (1.0 / math.sqrt(channels))             # Conv1d(C, C//16, 1)
            w2 = jax.random.normal(k2, (channels, hidden), jnp.float32) \
                 * (1.0 / math.sqrt(hidden))               # Conv1d(C//16, C, 1)
            wc = jax.random.normal(k3, (2, 7), jnp.float32) \
                 * (1.0 / math.sqrt(14.0))                 # Conv1d(2, 1, 7, pad=3)
            self.params.append((w1, w2, wc))

    def update(self, x, index):
        self.residual[index] = x

    def __call__(self, x, index):
        w1, w2, wc = self.params[index]
        prob = gate_prob(x, w1.T, w2.T, wc.reshape(-1), tile_l=self.tile_l)
        prob_scalar = jnp.reshape(prob, ())

        # fit_residual, fused into the apply kernel.
        scale_eff = DC_SCALE if DC_SCALE > 0.1 else 0.1
        res_arrays, res_weights = [], []
        if index > 0:
            w = _residual_weights(index)
            for i in range(index):
                r = self.residual[i]
                if isinstance(r, (int, float)):
                    if r == 0.0:
                        continue                      # skip never-updated slots
                    r = jnp.full(x.shape, r, jnp.float32)
                res_arrays.append(jnp.asarray(r, jnp.float32))
                res_weights.append(float(w[i]))
        if not res_arrays:
            return x, prob_scalar                     # nothing to add -> out == x
        out = apply_residual(x, jnp.reshape(prob, (1,)), res_arrays, res_weights,
                             threshold=0.5, scale=scale_eff, tile_l=self.tile_l)
        return out, prob_scalar


# ----------------------------------------------------------------------------
# pure-JAX reference (mirrors the PyTorch forward) for correctness checking
# ----------------------------------------------------------------------------
def dr_reference(x, w1, w2, wc, residuals, index, scale):
    N, C, L = x.shape
    mx = jnp.max(x, axis=2)
    av = jnp.mean(x, axis=2)

    def mlp(v):
        return jnp.maximum(v @ w1.T, 0.0) @ w2.T

    ch = jax.nn.sigmoid(mlp(mx) + mlp(av))
    xg = x * ch[:, :, None]
    cmax = jnp.max(xg, axis=1)
    cavg = jnp.mean(xg, axis=1)
    zpad = jnp.zeros((N, 3), jnp.float32)
    pmax = jnp.concatenate([zpad, cmax, zpad], axis=1)
    pavg = jnp.concatenate([zpad, cavg, zpad], axis=1)
    acc = jnp.zeros((N, L), jnp.float32)
    for k in range(7):
        acc = acc + wc[0, k] * pmax[:, k:k + L] + wc[1, k] * pavg[:, k:k + L]
    prob = jnp.mean(jax.nn.sigmoid(acc))

    res = jnp.zeros_like(x)
    if index > 0:
        w = _residual_weights(index)
        for i in range(index):
            r = residuals[i]
            if isinstance(r, (int, float)):
                r = jnp.full(x.shape, r, jnp.float32)
            res = res + w[i] * r
    scale_eff = scale if scale > 0.1 else 0.1
    out = x + jnp.where(prob > 0.5, scale_eff, 0.0) * res
    return out, prob


if __name__ == "__main__":
    key = jax.random.PRNGKey(0)
    kx, kp, kr0, kr1 = jax.random.split(key, 4)

    N, C, L = 2, 32, 512            # batch, channels (>=16), sequence length
    num_layers, index = 3, 2
    tile_l = 128                    # 4 L-tiles -> exercises the phased grid

    x = jax.random.normal(kx, (N, C, L), jnp.float32)
    mod = DRModulePallas(C, num_layers=num_layers, threshold=0.5, key=kp,
                         tile_l=tile_l)
    # residuals from "earlier layers" (exercise the fused weighted-residual sum)
    mod.update(0.5 * jax.random.normal(kr0, (N, C, L), jnp.float32), 0)
    mod.update(0.5 * jax.random.normal(kr1, (N, C, L), jnp.float32), 1)

    # Reference computed BEFORE the Pallas call: x is donated to the apply
    # kernel via input_output_aliases and must not be read afterwards.
    w1, w2, wc = mod.params[index]
    ref_out, ref_prob = dr_reference(x, w1, w2, wc, mod.residual, index, DC_SCALE)
    ref_out = jax.block_until_ready(ref_out)
    ref_prob = jax.block_until_ready(ref_prob)

    out, prob = mod(x, index)
    out = jax.block_until_ready(out)
    prob = jax.block_until_ready(prob)

    assert out.shape == (N, C, L) and out.dtype == jnp.float32
    assert np.allclose(np.asarray(out), np.asarray(ref_out), atol=2e-3, rtol=1e-4), \
        "output mismatch vs reference"
    assert abs(float(prob) - float(ref_prob)) < 5e-3, "proj mismatch vs reference"

    print("KERNEL_OK")
</pallas_src>

<mosaic_0001>
module attributes {stable_mosaic.version = 11 : i64} {
  func.func @_gate_prob_kernel(%arg0: i32, %arg1: i32, %arg2: memref<2x32x128xf32, #tpu.memory_space<vmem>>, %arg3: memref<32x2xf32, #tpu.memory_space<vmem>>, %arg4: memref<2x32xf32, #tpu.memory_space<vmem>>, %arg5: memref<14xf32, #tpu.memory_space<smem>>, %arg6: memref<1x1xf32, #tpu.memory_space<vmem>>, %arg7: memref<2x32xf32, #tpu.memory_space<vmem>>, %arg8: memref<2x32xf32, #tpu.memory_space<vmem>>, %arg9: memref<2x32x1xf32, #tpu.memory_space<vmem>>, %arg10: memref<2x512xf32, #tpu.memory_space<vmem>>, %arg11: memref<2x512xf32, #tpu.memory_space<vmem>>) attributes {dimension_semantics = [#tpu.dimension_semantics<arbitrary>, #tpu.dimension_semantics<arbitrary>], iteration_bounds = array<i64: 2, 4>, scalar_prefetch = 0 : i64, scratch_operands = 5 : i64, tpu.core_type = #tpu.core_type<tc>, window_params = [{transform_indices = @transform_0, window_bounds = array<i64: 2, 32, 128>}, {pipeline_mode = #tpu.pipeline_mode<synchronous>, transform_indices = @transform_1, window_bounds = array<i64: 32, 2>}, {pipeline_mode = #tpu.pipeline_mode<synchronous>, transform_indices = @transform_2, window_bounds = array<i64: 2, 32>}, {transform_indices = @transform_3, window_bounds = array<i64: 14>}, {pipeline_mode = #tpu.pipeline_mode<synchronous>, transform_indices = @transform_4, window_bounds = array<i64: 1, 1>}]} {
    %c0_i32 = arith.constant 0 : i32
    %0 = arith.cmpi eq, %arg0, %c0_i32 : i32
    %c0_i32_0 = arith.constant 0 : i32
    %1 = arith.cmpi eq, %arg1, %c0_i32_0 : i32
    %2 = arith.andi %0, %1 : i1
    %3 = arith.extui %2 : i1 to i32
    %c0_i32_1 = arith.constant 0 : i32
    %4 = arith.cmpi ne, %3, %c0_i32_1 : i32
    scf.if %4 {
      %cst = arith.constant 0xFF800000 : f32
      %21 = vector.broadcast %cst : f32 to vector<2x32xf32>
      %c0 = arith.constant 0 : index
      %c0_10 = arith.constant 0 : index
      %22 = vector.load %arg7[%c0, %c0_10] : memref<2x32xf32, #tpu.memory_space<vmem>>, vector<2x32xf32>
      tpu.vector_store %arg7[%c0, %c0_10], %21 {strides = array<i32>} : memref<2x32xf32, #tpu.memory_space<vmem>>, vector<2x32xf32>,
      %cst_11 = arith.constant 0.000000e+00 : f32
      %23 = vector.broadcast %cst_11 : f32 to vector<2x32xf32>
      %c0_12 = arith.constant 0 : index
      %c0_13 = arith.constant 0 : index
      %24 = vector.load %arg8[%c0_12, %c0_13] : memref<2x32xf32, #tpu.memory_space<vmem>>, vector<2x32xf32>
      tpu.vector_store %arg8[%c0_12, %c0_13], %23 {strides = array<i32>} : memref<2x32xf32, #tpu.memory_space<vmem>>, vector<2x32xf32>,
    } else {
    }
    %c0_i32_2 = arith.constant 0 : i32
    %5 = arith.cmpi eq, %arg0, %c0_i32_2 : i32
    %6 = arith.extui %5 : i1 to i32
    %c0_i32_3 = arith.constant 0 : i32
    %7 = arith.cmpi ne, %6, %c0_i32_3 : i32
    scf.if %7 {
      %c0 = arith.constant 0 : index
      %c0_10 = arith.constant 0 : index
      %c0_11 = arith.constant 0 : index
      %21 = vector.load %arg2[%c0, %c0_10, %c0_11] : memref<2x32x128xf32, #tpu.memory_space<vmem>>, vector<2x32x128xf32>
      %c0_12 = arith.constant 0 : index
      %c0_13 = arith.constant 0 : index
      %22 = vector.load %arg7[%c0_12, %c0_13] : memref<2x32xf32, #tpu.memory_space<vmem>>, vector<2x32xf32>
      %cst = arith.constant dense<0xFF800000> : vector<2x32xf32>
      %23 = vector.multi_reduction <maximumf>, %21, %cst [2] : vector<2x32x128xf32> to vector<2x32xf32>
      %24 = arith.maximumf %22, %23 : vector<2x32xf32>
      %c0_14 = arith.constant 0 : index
      %c0_15 = arith.constant 0 : index
      %25 = vector.load %arg7[%c0_14, %c0_15] : memref<2x32xf32, #tpu.memory_space<vmem>>, vector<2x32xf32>
      tpu.vector_store %arg7[%c0_14, %c0_15], %24 {strides = array<i32>} : memref<2x32xf32, #tpu.memory_space<vmem>>, vector<2x32xf32>,
      %c0_16 = arith.constant 0 : index
      %c0_17 = arith.constant 0 : index
      %26 = vector.load %arg8[%c0_16, %c0_17] : memref<2x32xf32, #tpu.memory_space<vmem>>, vector<2x32xf32>
      %cst_18 = arith.constant dense<0.000000e+00> : vector<2x32xf32>
      %27 = vector.multi_reduction <add>, %21, %cst_18 [2] : vector<2x32x128xf32> to vector<2x32xf32>
      %28 = arith.addf %26, %27 : vector<2x32xf32>
      %c0_19 = arith.constant 0 : index
      %c0_20 = arith.constant 0 : index
      %29 = vector.load %arg8[%c0_19, %c0_20] : memref<2x32xf32, #tpu.memory_space<vmem>>, vector<2x32xf32>
      tpu.vector_store %arg8[%c0_19, %c0_20], %28 {strides = array<i32>} : memref<2x32xf32, #tpu.memory_space<vmem>>, vector<2x32xf32>,
    } else {
    }
    %c1_i32 = arith.constant 1 : i32
    %8 = arith.cmpi eq, %arg0, %c1_i32 : i32
    %c0_i32_4 = arith.constant 0 : i32
    %9 = arith.cmpi eq, %arg1, %c0_i32_4 : i32
    %10 = arith.andi %8, %9 : i1
    %11 = arith.extui %10 : i1 to i32
    %c0_i32_5 = arith.constant 0 : i32
    %12 = arith.cmpi ne, %11, %c0_i32_5 : i32
    scf.if %12 {
      %c0 = arith.constant 0 : index
      %c0_10 = arith.constant 0 : index
      %21 = vector.load %arg3[%c0, %c0_10] : memref<32x2xf32, #tpu.memory_space<vmem>>, vector<32x2xf32>
      %c0_11 = arith.constant 0 : index
      %c0_12 = arith.constant 0 : index
      %22 = vector.load %arg4[%c0_11, %c0_12] : memref<2x32xf32, #tpu.memory_space<vmem>>, vector<2x32xf32>
      %c0_13 = arith.constant 0 : index
      %c0_14 = arith.constant 0 : index
      %23 = vector.load %arg7[%c0_13, %c0_14] : memref<2x32xf32, #tpu.memory_space<vmem>>, vector<2x32xf32>
      %c0_15 = arith.constant 0 : index
      %c0_16 = arith.constant 0 : index
      %24 = vector.load %arg8[%c0_15, %c0_16] : memref<2x32xf32, #tpu.memory_space<vmem>>, vector<2x32xf32>
      %cst = arith.constant 0.001953125 : f32
      %25 = vector.broadcast %cst : f32 to vector<2x32xf32>
      %26 = arith.mulf %24, %25 : vector<2x32xf32>
      %cst_17 = arith.constant dense<0.000000e+00> : vector<2x2xf32>
      %27 = tpu.matmul %23, %21, %cst_17 {dimension_numbers = #tpu.dot_dimension_numbers<[1], [0], [0], [1], [0, 0, 1, 1], [], []>} : vector<2x32xf32>, vector<32x2xf32>, vector<2x2xf32> -> vector<2x2xf32>
      %cst_18 = arith.constant 0.000000e+00 : f32
      %28 = vector.broadcast %cst_18 : f32 to vector<2x2xf32>
      %29 = arith.maximumf %27, %28 : vector<2x2xf32>
      %cst_19 = arith.constant dense<0.000000e+00> : vector<2x32xf32>
      %30 = tpu.matmul %29, %22, %cst_19 {dimension_numbers = #tpu.dot_dimension_numbers<[1], [0], [0], [1], [0, 0, 1, 1], [], []>} : vector<2x2xf32>, vector<2x32xf32>, vector<2x32xf32> -> vector<2x32xf32>
      %cst_20 = arith.constant dense<0.000000e+00> : vector<2x2xf32>
      %31 = tpu.matmul %26, %21, %cst_20 {dimension_numbers = #tpu.dot_dimension_numbers<[1], [0], [0], [1], [0, 0, 1, 1], [], []>} : vector<2x32xf32>, vector<32x2xf32>, vector<2x2xf32> -> vector<2x2xf32>
      %cst_21 = arith.constant 0.000000e+00 : f32
      %32 = vector.broadcast %cst_21 : f32 to vector<2x2xf32>
      %33 = arith.maximumf %31, %32 : vector<2x2xf32>
      %cst_22 = arith.constant dense<0.000000e+00> : vector<2x32xf32>
      %34 = tpu.matmul %33, %22, %cst_22 {dimension_numbers = #tpu.dot_dimension_numbers<[1], [0], [0], [1], [0, 0, 1, 1], [], []>} : vector<2x2xf32>, vector<2x32xf32>, vector<2x32xf32> -> vector<2x32xf32>
      %35 = arith.addf %30, %34 : vector<2x32xf32>
      %36 = arith.negf %35 : vector<2x32xf32>
      %37 = math.exp %36 : vector<2x32xf32>
      %cst_23 = arith.constant 1.000000e+00 : f32
      %38 = vector.broadcast %cst_23 : f32 to vector<2x32xf32>
      %39 = arith.addf %38, %37 : vector<2x32xf32>
      %40 = arith.divf %38, %39 : vector<2x32xf32>
      %41 = vector.shape_cast %40 : vector<2x32xf32> to vector<2x32x1xf32>
      %c0_24 = arith.constant 0 : index
      %c0_25 = arith.constant 0 : index
      %c0_26 = arith.constant 0 : index
      %42 = vector.load %arg9[%c0_24, %c0_25, %c0_26] : memref<2x32x1xf32, #tpu.memory_space<vmem>>, vector<2x32x1xf32>
      tpu.vector_store %arg9[%c0_24, %c0_25, %c0_26], %41 {strides = array<i32>} : memref<2x32x1xf32, #tpu.memory_space<vmem>>, vector<2x32x1xf32>,
    } else {
    }
    %c1_i32_6 = arith.constant 1 : i32
    %13 = arith.cmpi eq, %arg0, %c1_i32_6 : i32
    %14 = arith.extui %13 : i1 to i32
    %c0_i32_7 = arith.constant 0 : i32
    %15 = arith.cmpi ne, %14, %c0_i32_7 : i32
    scf.if %15 {
      %c0 = arith.constant 0 : index
      %c0_10 = arith.constant 0 : index
      %c0_11 = arith.constant 0 : index
      %21 = vector.load %arg2[%c0, %c0_10, %c0_11] : memref<2x32x128xf32, #tpu.memory_space<vmem>>, vector<2x32x128xf32>
      %c0_12 = arith.constant 0 : index
      %c0_13 = arith.constant 0 : index
      %c0_14 = arith.constant 0 : index
      %22 = vector.load %arg9[%c0_12, %c0_13, %c0_14] : memref<2x32x1xf32, #tpu.memory_space<vmem>>, vector<2x32x1xf32>
      %23 = vector.broadcast %22 : vector<2x32x1xf32> to vector<2x32x128xf32>
      %24 = arith.mulf %21, %23 : vector<2x32x128xf32>
      %c128_i32 = arith.constant 128 : i32
      %25 = arith.muli %arg1, %c128_i32 : i32
      %26 = tpu.assume_multiple %25, 128 : i32
      %cst = arith.constant dense<0xFF800000> : vector<2x128xf32>
      %27 = vector.multi_reduction <maximumf>, %24, %cst [1] : vector<2x32x128xf32> to vector<2x128xf32>
      %c0_15 = arith.constant 0 : index
      %28 = arith.index_cast %26 : i32 to index
      %29 = vector.load %arg10[%c0_15, %28] : memref<2x512xf32, #tpu.memory_space<vmem>>, vector<2x128xf32>
      tpu.vector_store %arg10[%c0_15, %28], %27 {strides = array<i32>} : memref<2x512xf32, #tpu.memory_space<vmem>>, vector<2x128xf32>,
      %cst_16 = arith.constant dense<0.000000e+00> : vector<2x128xf32>
      %30 = vector.multi_reduction <add>, %24, %cst_16 [1] : vector<2x32x128xf32> to vector<2x128xf32>
      %cst_17 = arith.constant 3.200000e+01 : f32
      %31 = vector.broadcast %cst_17 : f32 to vector<2x128xf32>
      %32 = arith.divf %30, %31 : vector<2x128xf32>
      %c0_18 = arith.constant 0 : index
      %33 = arith.index_cast %26 : i32 to index
      %34 = vector.load %arg11[%c0_18, %33] : memref<2x512xf32, #tpu.memory_space<vmem>>, vector<2x128xf32>
      tpu.vector_store %arg11[%c0_18, %33], %32 {strides = array<i32>} : memref<2x512xf32, #tpu.memory_space<vmem>>, vector<2x128xf32>,
    } else {
    }
    %c1_i32_8 = arith.constant 1 : i32
    %16 = arith.cmpi eq, %arg0, %c1_i32_8 : i32
    %c3_i32 = arith.constant 3 : i32
    %17 = arith.cmpi eq, %arg1, %c3_i32 : i32
    %18 = arith.andi %16, %17 : i1
    %19 = arith.extui %18 : i1 to i32
    %c0_i32_9 = arith.constant 0 : i32
    %20 = arith.cmpi ne, %19, %c0_i32_9 : i32
    scf.if %20 {
      %c0 = arith.constant 0 : index
      %c0_10 = arith.constant 0 : index
      %21 = vector.load %arg10[%c0, %c0_10] : memref<2x512xf32, #tpu.memory_space<vmem>>, vector<2x512xf32>
      %c0_11 = arith.constant 0 : index
      %c0_12 = arith.constant 0 : index
      %22 = vector.load %arg11[%c0_11, %c0_12] : memref<2x512xf32, #tpu.memory_space<vmem>>, vector<2x512xf32>
      %cst = arith.constant 0.000000e+00 : f32
      %23 = vector.broadcast %cst : f32 to vector<2x512xf32>
      %c0_13 = arith.constant 0 : index
      %24 = memref.load %arg5[%c0_13] : memref<14xf32, #tpu.memory_space<smem>>
      %cst_14 = arith.constant 0.000000e+00 : f32
      %25 = vector.broadcast %cst_14 : f32 to vector<2x3xf32>
      %26 = vector.extract_strided_slice %21 {offsets = [0, 0], sizes = [2, 509], strides = [1, 1]} : vector<2x512xf32> to vector<2x509xf32>
      %27 = tpu.concatenate %25, %26 in 1 : vector<2x3xf32>, vector<2x509xf32> -> vector<2x512xf32>
      %28 = vector.broadcast %24 : f32 to vector<2x512xf32>
      %29 = arith.mulf %28, %27 : vector<2x512xf32>
      %30 = arith.addf %23, %29 : vector<2x512xf32>
      %c7 = arith.constant 7 : index
      %31 = memref.load %arg5[%c7] : memref<14xf32, #tpu.memory_space<smem>>
      %cst_15 = arith.constant 0.000000e+00 : f32
      %32 = vector.broadcast %cst_15 : f32 to vector<2x3xf32>
      %33 = vector.extract_strided_slice %22 {offsets = [0, 0], sizes = [2, 509], strides = [1, 1]} : vector<2x512xf32> to vector<2x509xf32>
      %34 = tpu.concatenate %32, %33 in 1 : vector<2x3xf32>, vector<2x509xf32> -> vector<2x512xf32>
      %35 = vector.broadcast %31 : f32 to vector<2x512xf32>
      %36 = arith.mulf %35, %34 : vector<2x512xf32>
      %37 = arith.addf %30, %36 : vector<2x512xf32>
      %c1 = arith.constant 1 : index
      %38 = memref.load %arg5[%c1] : memref<14xf32, #tpu.memory_space<smem>>
      %cst_16 = arith.constant 0.000000e+00 : f32
      %39 = vector.broadcast %cst_16 : f32 to vector<2x2xf32>
      %40 = vector.extract_strided_slice %21 {offsets = [0, 0], sizes = [2, 510], strides = [1, 1]} : vector<2x512xf32> to vector<2x510xf32>
      %41 = tpu.concatenate %39, %40 in 1 : vector<2x2xf32>, vector<2x510xf32> -> vector<2x512xf32>
      %42 = vector.broadcast %38 : f32 to vector<2x512xf32>
      %43 = arith.mulf %42, %41 : vector<2x512xf32>
      %44 = arith.addf %37, %43 : vector<2x512xf32>
      %c8 = arith.constant 8 : index
      %45 = memref.load %arg5[%c8] : memref<14xf32, #tpu.memory_space<smem>>
      %cst_17 = arith.constant 0.000000e+00 : f32
      %46 = vector.broadcast %cst_17 : f32 to vector<2x2xf32>
      %47 = vector.extract_strided_slice %22 {offsets = [0, 0], sizes = [2, 510], strides = [1, 1]} : vector<2x512xf32> to vector<2x510xf32>
      %48 = tpu.concatenate %46, %47 in 1 : vector<2x2xf32>, vector<2x510xf32> -> vector<2x512xf32>
      %49 = vector.broadcast %45 : f32 to vector<2x512xf32>
      %50 = arith.mulf %49, %48 : vector<2x512xf32>
      %51 = arith.addf %44, %50 : vector<2x512xf32>
      %c2 = arith.constant 2 : index
      %52 = memref.load %arg5[%c2] : memref<14xf32, #tpu.memory_space<smem>>
      %cst_18 = arith.constant 0.000000e+00 : f32
      %53 = vector.broadcast %cst_18 : f32 to vector<2x1xf32>
      %54 = vector.extract_strided_slice %21 {offsets = [0, 0], sizes = [2, 511], strides = [1, 1]} : vector<2x512xf32> to vector<2x511xf32>
      %55 = tpu.concatenate %53, %54 in 1 : vector<2x1xf32>, vector<2x511xf32> -> vector<2x512xf32>
      %56 = vector.broadcast %52 : f32 to vector<2x512xf32>
      %57 = arith.mulf %56, %55 : vector<2x512xf32>
      %58 = arith.addf %51, %57 : vector<2x512xf32>
      %c9 = arith.constant 9 : index
      %59 = memref.load %arg5[%c9] : memref<14xf32, #tpu.memory_space<smem>>
      %cst_19 = arith.constant 0.000000e+00 : f32
      %60 = vector.broadcast %cst_19 : f32 to vector<2x1xf32>
      %61 = vector.extract_strided_slice %22 {offsets = [0, 0], sizes = [2, 511], strides = [1, 1]} : vector<2x512xf32> to vector<2x511xf32>
      %62 = tpu.concatenate %60, %61 in 1 : vector<2x1xf32>, vector<2x511xf32> -> vector<2x512xf32>
      %63 = vector.broadcast %59 : f32 to vector<2x512xf32>
      %64 = arith.mulf %63, %62 : vector<2x512xf32>
      %65 = arith.addf %58, %64 : vector<2x512xf32>
      %c3 = arith.constant 3 : index
      %66 = memref.load %arg5[%c3] : memref<14xf32, #tpu.memory_space<smem>>
      %67 = vector.broadcast %66 : f32 to vector<2x512xf32>
      %68 = arith.mulf %67, %21 : vector<2x512xf32>
      %69 = arith.addf %65, %68 : vector<2x512xf32>
      %c10 = arith.constant 10 : index
      %70 = memref.load %arg5[%c10] : memref<14xf32, #tpu.memory_space<smem>>
      %71 = vector.broadcast %70 : f32 to vector<2x512xf32>
      %72 = arith.mulf %71, %22 : vector<2x512xf32>
      %73 = arith.addf %69, %72 : vector<2x512xf32>
      %c4 = arith.constant 4 : index
      %74 = memref.load %arg5[%c4] : memref<14xf32, #tpu.memory_space<smem>>
      %cst_20 = arith.constant 0.000000e+00 : f32
      %75 = vector.broadcast %cst_20 : f32 to vector<2x1xf32>
      %76 = vector.extract_strided_slice %21 {offsets = [0, 1], sizes = [2, 511], strides = [1, 1]} : vector<2x512xf32> to vector<2x511xf32>
      %77 = tpu.concatenate %76, %75 in 1 : vector<2x511xf32>, vector<2x1xf32> -> vector<2x512xf32>
      %78 = vector.broadcast %74 : f32 to vector<2x512xf32>
      %79 = arith.mulf %78, %77 : vector<2x512xf32>
      %80 = arith.addf %73, %79 : vector<2x512xf32>
      %c11 = arith.constant 11 : index
      %81 = memref.load %arg5[%c11] : memref<14xf32, #tpu.memory_space<smem>>
      %cst_21 = arith.constant 0.000000e+00 : f32
      %82 = vector.broadcast %cst_21 : f32 to vector<2x1xf32>
      %83 = vector.extract_strided_slice %22 {offsets = [0, 1], sizes = [2, 511], strides = [1, 1]} : vector<2x512xf32> to vector<2x511xf32>
      %84 = tpu.concatenate %83, %82 in 1 : vector<2x511xf32>, vector<2x1xf32> -> vector<2x512xf32>
      %85 = vector.broadcast %81 : f32 to vector<2x512xf32>
      %86 = arith.mulf %85, %84 : vector<2x512xf32>
      %87 = arith.addf %80, %86 : vector<2x512xf32>
      %c5 = arith.constant 5 : index
      %88 = memref.load %arg5[%c5] : memref<14xf32, #tpu.memory_space<smem>>
      %cst_22 = arith.constant 0.000000e+00 : f32
      %89 = vector.broadcast %cst_22 : f32 to vector<2x2xf32>
      %90 = vector.extract_strided_slice %21 {offsets = [0, 2], sizes = [2, 510], strides = [1, 1]} : vector<2x512xf32> to vector<2x510xf32>
      %91 = tpu.concatenate %90, %89 in 1 : vector<2x510xf32>, vector<2x2xf32> -> vector<2x512xf32>
      %92 = vector.broadcast %88 : f32 to vector<2x512xf32>
      %93 = arith.mulf %92, %91 : vector<2x512xf32>
      %94 = arith.addf %87, %93 : vector<2x512xf32>
      %c12 = arith.constant 12 : index
      %95 = memref.load %arg5[%c12] : memref<14xf32, #tpu.memory_space<smem>>
      %cst_23 = arith.constant 0.000000e+00 : f32
      %96 = vector.broadcast %cst_23 : f32 to vector<2x2xf32>
      %97 = vector.extract_strided_slice %22 {offsets = [0, 2], sizes = [2, 510], strides = [1, 1]} : vector<2x512xf32> to vector<2x510xf32>
      %98 = tpu.concatenate %97, %96 in 1 : vector<2x510xf32>, vector<2x2xf32> -> vector<2x512xf32>
      %99 = vector.broadcast %95 : f32 to vector<2x512xf32>
      %100 = arith.mulf %99, %98 : vector<2x512xf32>
      %101 = arith.addf %94, %100 : vector<2x512xf32>
      %c6 = arith.constant 6 : index
      %102 = memref.load %arg5[%c6] : memref<14xf32, #tpu.memory_space<smem>>
      %cst_24 = arith.constant 0.000000e+00 : f32
      %103 = vector.broadcast %cst_24 : f32 to vector<2x3xf32>
      %104 = vector.extract_strided_slice %21 {offsets = [0, 3], sizes = [2, 509], strides = [1, 1]} : vector<2x512xf32> to vector<2x509xf32>
      %105 = tpu.concatenate %104, %103 in 1 : vector<2x509xf32>, vector<2x3xf32> -> vector<2x512xf32>
      %106 = vector.broadcast %102 : f32 to vector<2x512xf32>
      %107 = arith.mulf %106, %105 : vector<2x512xf32>
      %108 = arith.addf %101, %107 : vector<2x512xf32>
      %c13 = arith.constant 13 : index
      %109 = memref.load %arg5[%c13] : memref<14xf32, #tpu.memory_space<smem>>
      %cst_25 = arith.constant 0.000000e+00 : f32
      %110 = vector.broadcast %cst_25 : f32 to vector<2x3xf32>
      %111 = vector.extract_strided_slice %22 {offsets = [0, 3], sizes = [2, 509], strides = [1, 1]} : vector<2x512xf32> to vector<2x509xf32>
      %112 = tpu.concatenate %111, %110 in 1 : vector<2x509xf32>, vector<2x3xf32> -> vector<2x512xf32>
      %113 = vector.broadcast %109 : f32 to vector<2x512xf32>
      %114 = arith.mulf %113, %112 : vector<2x512xf32>
      %115 = arith.addf %108, %114 : vector<2x512xf32>
      %116 = arith.negf %115 : vector<2x512xf32>
      %117 = math.exp %116 : vector<2x512xf32>
      %cst_26 = arith.constant 1.000000e+00 : f32
      %118 = vector.broadcast %cst_26 : f32 to vector<2x512xf32>
      %119 = arith.addf %118, %117 : vector<2x512xf32>
      %120 = arith.divf %118, %119 : vector<2x512xf32>
      %121 = vector.shape_cast %120 : vector<2x512xf32> to vector<1x2x512xf32>
      %cst_27 = arith.constant dense<0.000000e+00> : vector<1xf32>
      %122 = vector.multi_reduction <add>, %121, %cst_27 [1, 2] : vector<1x2x512xf32> to vector<1xf32>
      %123 = vector.shape_cast %122 : vector<1xf32> to vector<1x1x1xf32>
      %124 = vector.extract %123[0, 0, 0] : f32 from vector<1x1x1xf32>
      %cst_28 = arith.constant 1.024000e+03 : f32
      %125 = arith.divf %124, %cst_28 : f32
      %126 = vector.broadcast %125 : f32 to vector<1x1xf32>
      %c0_29 = arith.constant 0 : index
      %c0_30 = arith.constant 0 : index
      %127 = vector.load %arg6[%c0_29, %c0_30] : memref<1x1xf32, #tpu.memory_space<vmem>>, vector<1x1xf32>
      tpu.vector_store %arg6[%c0_29, %c0_30], %126 {strides = array<i32>} : memref<1x1xf32, #tpu.memory_space<vmem>>, vector<1x1xf32>,
    } else {
    }
    return
  }
  func.func @transform_0(%arg0: i32, %arg1: i32) -> (i32, i32, i32) {
    %c0_i32 = arith.constant 0 : i32
    %c0_i32_0 = arith.constant 0 : i32
    %c0_i32_1 = arith.constant 0 : i32
    return %c0_i32, %c0_i32_0, %arg1 : i32, i32, i32
  }
  func.func @transform_1(%arg0: i32, %arg1: i32) -> (i32, i32) {
    %c0_i32 = arith.constant 0 : i32
    %c0_i32_0 = arith.constant 0 : i32
    %c0_i32_1 = arith.constant 0 : i32
    return %c0_i32, %c0_i32_0 : i32, i32
  }
  func.func @transform_2(%arg0: i32, %arg1: i32) -> (i32, i32) {
    %c0_i32 = arith.constant 0 : i32
    %c0_i32_0 = arith.constant 0 : i32
    %c0_i32_1 = arith.constant 0 : i32
    return %c0_i32, %c0_i32_0 : i32, i32
  }
  func.func @transform_3(%arg0: i32, %arg1: i32) -> i32 {
    %c0_i32 = arith.constant 0 : i32
    %c0_i32_0 = arith.constant 0 : i32
    return %c0_i32 : i32
  }
  func.func @transform_4(%arg0: i32, %arg1: i32) -> (i32, i32) {
    %c0_i32 = arith.constant 0 : i32
    %c0_i32_0 = arith.constant 0 : i32
    %c0_i32_1 = arith.constant 0 : i32
    return %c0_i32, %c0_i32_0 : i32, i32
  }
}

</mosaic_0001>

<llo_original>
// kernel: tpu_custom_call.1
$region0: #{tpu_custom_call.1}
  #allocation0 [shape = 'u32[]', space=smem, size = 0x4, offset = 0x4, fixed_abs, tag = 'smem constant byte address 0x4 - core index']
  #allocation1 [shape = 'u32[144,128]{1,0:T(1,128)}', space=vmem, size = 0x12000, scoped, tag = 'internal scratch']
  #allocation2 [shape = 'f32[2,32]{1,0:T(2,128)}', space=vmem, size = 0x400, scoped, tag = 'scratch operand']
  #allocation3 [shape = 'f32[2,32]{1,0:T(2,128)}', space=vmem, size = 0x400, scoped, tag = 'scratch operand']
  #allocation4 [shape = 'f32[2,32,1]{2,1,0:T(8,128)}', space=vmem, size = 0x8000, scoped, tag = 'scratch operand']
  #allocation5 [shape = 'f32[2,512]{1,0:T(2,128)}', space=vmem, size = 0x1000, scoped, tag = 'scratch operand']
  #allocation6 [shape = 'f32[2,512]{1,0:T(2,128)}', space=vmem, size = 0x1000, scoped, tag = 'scratch operand']
  %s0 = inlined_call_operand.hbm [shape: f32[2,32,512], index: 0, kind: input, shape index: {}]
  %s1 = inlined_call_operand.vmem [shape: f32[32,2], index: 1, kind: input, shape index: {}]
  %s2 = inlined_call_operand.vmem [shape: f32[2,32], index: 2, kind: input, shape index: {}]
  %s3 = inlined_call_operand.vmem [shape: f32[14], index: 3, kind: input, shape index: {}]
  %s4 = inlined_call_operand.hbm [shape: f32[1,1], index: 4, kind: output, shape index: {}]
  %s5 = sld [smem:[#allocation0]]
  $region77: #{tpu_custom_call.1} parent=0
    _
  %s7 = ssub.s32 1, %s5
  %s8 = scalar_select 0, %s7, %s5
  $region1: #{tpu_custom_call.1} parent=0
    #allocation7 [shape = 'u8[65536]{0}', space=vmem, size = 0x10000, scoped, tag = 'input window, operand 0']
    #allocation8 [shape = 's32[2]{0}', space=sflag, size = 0x8, scoped, tag = 'scoped memory for tpu_custom_call.1']
    #allocation9 [shape = 's32[2]{0}', space=sflag, size = 0x8, scoped, tag = 'scoped memory for tpu_custom_call.1']
    #allocation10 [shape = 's32[2]{0}', space=sflag, size = 0x8, scoped, tag = 'scoped memory for tpu_custom_call.1']
    #allocation11 [shape = 'u8[512]{0}', space=smem, size = 0x200, scoped, tag = 'input window, operand 3, single buffered']
    #allocation12 [shape = 'u8[512]{0}', space=vmem, size = 0x400, scoped, tag = 'output window, operand 0, single buffered']
    %9 = vsyncpa [#allocation8], 0
    %s10 = scalar_lea.sflag [#allocation8], 1
    %11 = vsyncpa %s10, 0
    %12 = vsyncpa [#allocation10], 0
    %13 = vsyncpa [#allocation9], 0
    loop: start=0, step=1, limit=10
    $region2: #{tpu_custom_call.1} parent=1 // loop_pre_header
      _
    $region3: #{tpu_custom_call.1} parent=1 // loop_header
      %s15 = sphi 0, %s19
      %p16 = scmp.ge.s32.totalorder %s15, 10
      %s22 = sphi 0, %s34
      %s23 = sphi 0, %s30
      %s24 = sphi 0, %s22
      %s25 = sphi 0, %s23
      %s26 = sphi 0, %s24
      %s27 = sphi 0, %s25
      %s37 = sphi 0, %s39
      %s40 = sphi 0, %s37
      %s41 = sphi 0, %s40
      %s57 = sphi 0, %s41
      %s61 = sphi 0, %s61
      %s63 = sphi 0, %s61
      %s64 = sphi 0, %s63
      %s78 = sphi 0, %s64
      %s82 = sphi 0, %s82
      %s84 = sphi 0, %s82
      %s85 = sphi 0, %s84
      %s99 = sphi 0, %s85
      %s103 = sphi 0, %s103
      %s105 = sphi 0, %s103
      %s106 = sphi 0, %s105
      %s120 = sphi 0, %s106
      %s124 = sphi 0, %s124
      %s126 = sphi 0, %s124
      %s127 = sphi 0, %s126
      %s141 = sphi 0, %s127
    $region4: #{tpu_custom_call.1} parent=1 // loop_header_branch
      %18 = sbr.rel (%p16) target = $region8
    $region5: #{tpu_custom_call.1} parent=1 // loop_body
      %s20 = ssub.s32 %s15, 1
      %s21 = ssub.s32 %s15, 2
      %s28 = sadd.s32 1, %s23
      %p29 = scmp.ge.s32.totalorder %s28, 4
      %s30 = scalar_select %p29, 0, %s28
      %s31 = sadd.s32 1, %s22
      %s32 = scalar_select %p29, %s31, %s22
      %p33 = scmp.ge.s32.totalorder %s32, 2
      %s34 = scalar_select %p33, 0, %s32
      %s35 = ssub.s32 %s23, %s30
      %p36 = scmp.eq.s32.totalorder %s35, 0
      %s38 = sadd.s32 %s37, 1
      %s39 = scalar_select %p36, %s37, %s38
      %p42 = pneg %p36
      %p43 = scmp.eq.s32.totalorder %s15, 7
      %p44 = por %p42, %p43
      %p45 = scmp.ne.s32.totalorder %s37, %s40
      %p46 = scmp.eq.s32.totalorder %s15, 0
      %p47 = por %p45, %p46
      %p48 = scmp.ne.s32.totalorder %s37, %s40
      %p49 = scmp.eq.s32.totalorder %s20, 7
      %p50 = por %p48, %p49
      %p51 = scmp.ne.s32.totalorder %s40, %s41
      %p52 = scmp.eq.s32.totalorder %s20, 0
      %p53 = por %p51, %p52
      %p54 = scmp.ne.s32.totalorder %s40, %s41
      %p55 = scmp.eq.s32.totalorder %s21, 7
      %p56 = por %p54, %p55
      %p58 = scmp.ne.s32.totalorder %s41, %s57
      %p59 = scmp.eq.s32.totalorder %s21, 0
      %p60 = por %p58, %p59
      %s62 = sadd.s32 %s61, 1
      %p65 = scmp.eq.s32.totalorder %s15, 7
      %p66 = scmp.ne.s32.totalorder %s61, %s63
      %p67 = scmp.eq.s32.totalorder %s15, 0
      %p68 = por %p66, %p67
      %p69 = scmp.ne.s32.totalorder %s61, %s63
      %p70 = scmp.eq.s32.totalorder %s20, 7
      %p71 = por %p69, %p70
      %p72 = scmp.ne.s32.totalorder %s63, %s64
      %p73 = scmp.eq.s32.totalorder %s20, 0
      %p74 = por %p72, %p73
      %p75 = scmp.ne.s32.totalorder %s63, %s64
      %p76 = scmp.eq.s32.totalorder %s21, 7
      %p77 = por %p75, %p76
      %p79 = scmp.ne.s32.totalorder %s64, %s78
      %p80 = scmp.eq.s32.totalorder %s21, 0
      %p81 = por %p79, %p80
      %s83 = sadd.s32 %s82, 1
      %p86 = scmp.eq.s32.totalorder %s15, 7
      %p87 = scmp.ne.s32.totalorder %s82, %s84
      %p88 = scmp.eq.s32.totalorder %s15, 0
      %p89 = por %p87, %p88
      %p90 = scmp.ne.s32.totalorder %s82, %s84
      %p91 = scmp.eq.s32.totalorder %s20, 7
      %p92 = por %p90, %p91
      %p93 = scmp.ne.s32.totalorder %s84, %s85
      %p94 = scmp.eq.s32.totalorder %s20, 0
      %p95 = por %p93, %p94
      %p96 = scmp.ne.s32.totalorder %s84, %s85
      %p97 = scmp.eq.s32.totalorder %s21, 7
      %p98 = por %p96, %p97
      %p100 = scmp.ne.s32.totalorder %s85, %s99
      %p101 = scmp.eq.s32.totalorder %s21, 0
      %p102 = por %p100, %p101
      %s104 = sadd.s32 %s103, 1
      %p107 = scmp.eq.s32.totalorder %s15, 7
      %p108 = scmp.ne.s32.totalorder %s103, %s105
      %p109 = scmp.eq.s32.totalorder %s15, 0
      %p110 = por %p108, %p109
      %p111 = scmp.ne.s32.totalorder %s103, %s105
      %p112 = scmp.eq.s32.totalorder %s20, 7
      %p113 = por %p111, %p112
      %p114 = scmp.ne.s32.totalorder %s105, %s106
      %p115 = scmp.eq.s32.totalorder %s20, 0
      %p116 = por %p114, %p115
      %p117 = scmp.ne.s32.totalorder %s105, %s106
      %p118 = scmp.eq.s32.totalorder %s21, 7
      %p119 = por %p117, %p118
      %p121 = scmp.ne.s32.totalorder %s106, %s120
      %p122 = scmp.eq.s32.totalorder %s21, 0
      %p123 = por %p121, %p122
      %s125 = sadd.s32 %s124, 1
      %p128 = scmp.eq.s32.totalorder %s15, 7
      %p129 = scmp.ne.s32.totalorder %s124, %s126
      %p130 = scmp.eq.s32.totalorder %s15, 0
      %p131 = por %p129, %p130
      %p132 = scmp.ne.s32.totalorder %s124, %s126
      %p133 = scmp.eq.s32.totalorder %s20, 7
      %p134 = por %p132, %p133
      %p135 = scmp.ne.s32.totalorder %s126, %s127
      %p136 = scmp.eq.s32.totalorder %s20, 0
      %p137 = por %p135, %p136
      %p138 = scmp.ne.s32.totalorder %s126, %s127
      %p139 = scmp.eq.s32.totalorder %s21, 7
      %p140 = por %p138, %p139
      %p142 = scmp.ne.s32.totalorder %s127, %s141
      %p143 = scmp.eq.s32.totalorder %s21, 0
      %p144 = por %p142, %p143
      %p145 = scmp.le.s32.totalorder 1, %s15
      %p146 = scmp.lt.s32.totalorder %s15, 9
      %p147 = pnand %p145, %p146
      %p148 = pneg %p147
      // Predicated region
      $region9: #{tpu_custom_call.1} parent=5 // pred_check
        _
      $region10: #{tpu_custom_call.1} parent=5 // pred_check_branch
        %150 = sbr.rel (%p147) target = $region12
      $region11: #{tpu_custom_call.1} parent=5 // pred_region
        %s151 = ssub.s32 %s15, 1
        // Predicated region
        $region13: #{tpu_custom_call.1} parent=11 // pred_check
          %p152 = pneg %p74
        $region14: #{tpu_custom_call.1} parent=11 // pred_check_branch
          %154 = sbr.rel (%p152) target = $region16
        $region15: #{tpu_custom_call.1} parent=11 // pred_region
          _
        $region16: #{tpu_custom_call.1} parent=11 // pred_fallthru
          _
        // Predicated region
        $region17: #{tpu_custom_call.1} parent=11 // pred_check
          %p155 = pneg %p95
        $region18: #{tpu_custom_call.1} parent=11 // pred_check_branch
          %157 = sbr.rel (%p155) target = $region20
        $region19: #{tpu_custom_call.1} parent=11 // pred_region
          _
        $region20: #{tpu_custom_call.1} parent=11 // pred_fallthru
          _
        // Predicated region
        $region21: #{tpu_custom_call.1} parent=11 // pred_check
          %p158 = pneg %p116
        $region22: #{tpu_custom_call.1} parent=11 // pred_check_branch
          %160 = sbr.rel (%p158) target = $region24
        $region23: #{tpu_custom_call.1} parent=11 // pred_region
          %s162 = ssub.s32 16, 16
          %163 = vsyncadd [#allocation10], %s162
          %s165 = sshll.u32 %s3, 4
          %s166 = int_to_ptr.vmem [resolvable:$true] %s165
          %168 = dma.vmem_to_smem %s166, 16, [#allocation11], [#allocation10]
        $region24: #{tpu_custom_call.1} parent=11 // pred_fallthru
          _
      $region12: #{tpu_custom_call.1} parent=5 // pred_fallthru
        _
      %p169 = scmp.lt.s32.totalorder %s15, 8
      // Predicated region
      $region25: #{tpu_custom_call.1} parent=5 // pred_check
        %p170 = pneg %p169
      $region26: #{tpu_custom_call.1} parent=5 // pred_check_branch
        %172 = sbr.rel (%p170) target = $region28
      $region27: #{tpu_custom_call.1} parent=5 // pred_region
        // Predicated region
        $region29: #{tpu_custom_call.1} parent=27 // pred_check
          %p173 = pneg %p47
        $region30: #{tpu_custom_call.1} parent=27 // pred_check_branch
          %175 = sbr.rel (%p173) target = $region32
        $region31: #{tpu_custom_call.1} parent=27 // pred_region
          %s176 = sand.u32 %s37, 1
          %s177 = scalar_lea.sflag [#allocation8], %s176
          %s178 = sand.u32 %s37, 1
          %s179 = smul.addr %s178, 64
          %s180 = scalar_lea.vmem [#allocation7], %s179
          %s182 = ssub.s32 1024, 1024
          %183 = vsyncadd %s177, %s182
          %s184 = smul.addr %s23, 128
          %s185 = scalar_lea.hbm %s0, %s184
          %s186 = sshll.u32 %s180, 4
          %s187 = int_to_ptr.vmem [resolvable:$true] %s186
          %192 = dma.hbm_to_vmem [thread:$0]  %s185, 1024, %s187, %s177, 512, 128, 8
        $region32: #{tpu_custom_call.1} parent=27 // pred_fallthru
          _
      $region28: #{tpu_custom_call.1} parent=5 // pred_fallthru
        _
      %p193 = scmp.le.s32.totalorder 1, %s15
      %p194 = scmp.lt.s32.totalorder %s15, 9
      %p195 = pnand %p193, %p194
      %p196 = pneg %p195
      // Predicated region
      $region33: #{tpu_custom_call.1} parent=5 // pred_check
        _
      $region34: #{tpu_custom_call.1} parent=5 // pred_check_branch
        %198 = sbr.rel (%p195) target = $region36
      $region35: #{tpu_custom_call.1} parent=5 // pred_region
        %s199 = ssub.s32 %s15, 1
        %s200 = sand.u32 %s40, 1
        %s201 = scalar_lea.sflag [#allocation8], %s200
        %s202 = sand.u32 %s40, 1
        %s203 = smul.addr %s202, 64
        %s204 = scalar_lea.vmem [#allocation7], %s203
        // Predicated region
        $region37: #{tpu_custom_call.1} parent=35 // pred_check
          %p205 = pneg %p53
        $region38: #{tpu_custom_call.1} parent=35 // pred_check_branch
          %207 = sbr.rel (%p205) target = $region40
        $region39: #{tpu_custom_call.1} parent=35 // pred_region
          %208 = dma.done %s201, 1024
        $region40: #{tpu_custom_call.1} parent=35 // pred_fallthru
          _
        // Predicated region
        $region41: #{tpu_custom_call.1} parent=35 // pred_check
          %p209 = pneg %p116
        $region42: #{tpu_custom_call.1} parent=35 // pred_check_branch
          %211 = sbr.rel (%p209) target = $region44
        $region43: #{tpu_custom_call.1} parent=35 // pred_region
          %212 = dma.done [#allocation10], 16
        $region44: #{tpu_custom_call.1} parent=35 // pred_fallthru
          _
        %213 = sfence
        %s214 = sand.u32 %s40, 1
        %s215 = scalar_lea.sflag [#allocation8], %s214
        %s216 = sand.u32 %s40, 1
        %s217 = smul.addr %s216, 64
        %s218 = scalar_lea.vmem [#allocation7], %s217
        %p219 = pneg %p53
        %p220 = pneg %p50
        %p221 = pneg %p74
        %p222 = pneg %p71
        %p223 = pneg %p95
        %p224 = pneg %p92
        %p225 = pneg %p116
        %p226 = pneg %p113
        %p227 = pneg %p137
        %p228 = pneg %p134
        %p229 = scmp.eq.s32.totalorder %s24, 0
        %p230 = scmp.eq.s32.totalorder %s25, 0
        %p231 = pnand %p229, %p230
        %p232 = pneg %p231
        // Predicated region
        $region45: #{tpu_custom_call.1} parent=35 // pred_check
          _
        $region46: #{tpu_custom_call.1} parent=35 // pred_check_branch
          %234 = sbr.rel (%p231) target = $region48
        $region47: #{tpu_custom_call.1} parent=35 // pred_region
          %vm235 = vcmask 254976
          %236 = vst.msk [vmem:[#allocation2] sm:$0x3] %vm235, -inf
          %237 = vst.msk [vmem:[#allocation3] sm:$0x3] %vm235, 0.0
        $region48: #{tpu_custom_call.1} parent=35 // pred_fallthru
          _
        // Predicated region
        $region49: #{tpu_custom_call.1} parent=35 // pred_check
          %p238 = pneg %p229
        $region50: #{tpu_custom_call.1} parent=35 // pred_check_branch
          %240 = sbr.rel (%p238) target = $region52
        $region51: #{tpu_custom_call.1} parent=35 // pred_region
          %v241 = vld [vmem:[%s204] sm:$0xff]
          %v242 = vld [vmem:[%s204 + $0x8] sm:$0xff]
          %v243 = vld [vmem:[%s204 + $0x10] sm:$0xff]
          %v244 = vld [vmem:[%s204 + $0x18] sm:$0xff]
          %v245 = vld [vmem:[%s204 + $0x20] sm:$0xff]
          %v246 = vld [vmem:[%s204 + $0x28] sm:$0xff]
          %v247 = vld [vmem:[%s204 + $0x30] sm:$0xff]
          %v248 = vld [vmem:[%s204 + $0x38] sm:$0xff]
          %v249 = vld [vmem:[#allocation2] sm:$0x3]
          %250 = vmax.xlane.f32.xlu0 %v241
          %v251 = vpop.xlane.xlu0 %250
          %252 = vmax.xlane.f32.xlu0 %v242
          %v253 = vpop.xlane.xlu0 %252
          %254 = vmax.xlane.f32.xlu0 %v243
          %v255 = vpop.xlane.xlu0 %254
          %256 = vmax.xlane.f32.xlu0 %v244
          %v257 = vpop.xlane.xlu0 %256
          %258 = vmax.xlane.f32.xlu0 %v245
          %v259 = vpop.xlane.xlu0 %258
          %260 = vmax.xlane.f32.xlu0 %v246
          %v261 = vpop.xlane.xlu0 %260
          %262 = vmax.xlane.f32.xlu0 %v247
          %v263 = vpop.xlane.xlu0 %262
          %264 = vmax.xlane.f32.xlu0 %v248
          %v265 = vpop.xlane.xlu0 %264
          %v274 = vlaneseq
          %v275 = vand.u32 %v274, 127
          %v276 = vlaneseq
          %v277 = vshrl.u32 %v276, 7
          %v278 = vsub.s32 %v275, %v277
          %v279 = vrot.slane %v251, %v278
          %v280 = vadd.s32 %v275, 4294967288
          %v281 = vlaneseq
          %v282 = vshrl.u32 %v281, 7
          %v283 = vsub.s32 %v280, %v282
          %v284 = vrot.slane %v253, %v283
          %vm285 = vcmask 130112
          %v286 = vsel %vm285, %v284, %v279
          %v287 = vadd.s32 %v275, 4294967280
          %v288 = vlaneseq
          %v289 = vshrl.u32 %v288, 7
          %v290 = vsub.s32 %v287, %v289
          %v291 = vrot.slane %v255, %v290
          %vm292 = vcmask 195712
          %v293 = vsel %vm292, %v291, %v286
          %v294 = vadd.s32 %v275, 4294967272
          %v295 = vlaneseq
          %v296 = vshrl.u32 %v295, 7
          %v297 = vsub.s32 %v294, %v296
          %v298 = vrot.slane %v257, %v297
          %vm299 = vcmask 261312
          %v300 = vsel %vm299, %v298, %v293
          %v301 = vlaneseq
          %v302 = vshrl.u32 %v301, 7
          %v303 = vsub.s32 %v275, %v302
          %v304 = vrot.slane %v259, %v303
          %v305 = vlaneseq
          %v306 = vshrl.u32 %v305, 7
          %v307 = vsub.s32 %v280, %v306
          %v308 = vrot.slane %v261, %v307
          %v309 = vsel %vm285, %v308, %v304
          %v310 = vlaneseq
          %v311 = vshrl.u32 %v310, 7
          %v312 = vsub.s32 %v287, %v311
          %v313 = vrot.slane %v263, %v312
          %v314 = vsel %vm292, %v313, %v309
          %v315 = vlaneseq
          %v316 = vshrl.u32 %v315, 7
          %v317 = vsub.s32 %v294, %v316
          %v318 = vrot.slane %v265, %v317
          %v319 = vsel %vm299, %v318, %v314
          %vm320 = vcmask 1041409
          %v321 = vsel %vm320, %v319, %v300
          %v323 = vmax.f32 %v249, %v321
          %vm324 = vcmask 254976
          %325 = vst.msk [vmem:[#allocation2] sm:$0x3] %vm324, %v323
          %v326 = vld [vmem:[#allocation3] sm:$0x3]
          %327 = vadd.xlane.f32.xlu0 %v241
          %v328 = vpop.xlane.xlu0 %327
          %329 = vadd.xlane.f32.xlu0 %v242
          %v330 = vpop.xlane.xlu0 %329
          %331 = vadd.xlane.f32.xlu0 %v243
          %v332 = vpop.xlane.xlu0 %331
          %333 = vadd.xlane.f32.xlu0 %v244
          %v334 = vpop.xlane.xlu0 %333
          %335 = vadd.xlane.f32.xlu0 %v245
          %v336 = vpop.xlane.xlu0 %335
          %337 = vadd.xlane.f32.xlu0 %v246
          %v338 = vpop.xlane.xlu0 %337
          %339 = vadd.xlane.f32.xlu0 %v247
          %v340 = vpop.xlane.xlu0 %339
          %341 = vadd.xlane.f32.xlu0 %v248
          %v342 = vpop.xlane.xlu0 %341
          %v351 = vlaneseq
          %v352 = vshrl.u32 %v351, 7
          %v353 = vsub.s32 %v275, %v352
          %v354 = vrot.slane %v328, %v353
          %v355 = vlaneseq
          %v356 = vshrl.u32 %v355, 7
          %v357 = vsub.s32 %v280, %v356
          %v358 = vrot.slane %v330, %v357
          %v359 = vsel %vm285, %v358, %v354
          %v360 = vlaneseq
          %v361 = vshrl.u32 %v360, 7
          %v362 = vsub.s32 %v287, %v361
          %v363 = vrot.slane %v332, %v362
          %v364 = vsel %vm292, %v363, %v359
          %v365 = vlaneseq
          %v366 = vshrl.u32 %v365, 7
          %v367 = vsub.s32 %v294, %v366
          %v368 = vrot.slane %v334, %v367
          %v369 = vsel %vm299, %v368, %v364
          %v370 = vlaneseq
          %v371 = vshrl.u32 %v370, 7
          %v372 = vsub.s32 %v275, %v371
          %v373 = vrot.slane %v336, %v372
          %v374 = vlaneseq
          %v375 = vshrl.u32 %v374, 7
          %v376 = vsub.s32 %v280, %v375
          %v377 = vrot.slane %v338, %v376
          %v378 = vsel %vm285, %v377, %v373
          %v379 = vlaneseq
          %v380 = vshrl.u32 %v379, 7
          %v381 = vsub.s32 %v287, %v380
          %v382 = vrot.slane %v340, %v381
          %v383 = vsel %vm292, %v382, %v378
          %v384 = vlaneseq
          %v385 = vshrl.u32 %v384, 7
          %v386 = vsub.s32 %v294, %v385
          %v387 = vrot.slane %v342, %v386
          %v388 = vsel %vm299, %v387, %v383
          %v389 = vsel %vm320, %v388, %v369
          %v391 = vadd.f32 %v326, %v389
          %392 = vst.msk [vmem:[#allocation3] sm:$0x3] %vm324, %v391
        $region52: #{tpu_custom_call.1} parent=35 // pred_fallthru
          _
        %p393 = scmp.eq.s32.totalorder %s24, 1
        %p394 = pnand %p393, %p230
        %p395 = pneg %p394
        // Predicated region
        $region53: #{tpu_custom_call.1} parent=35 // pred_check
          _
        $region54: #{tpu_custom_call.1} parent=35 // pred_check_branch
          %397 = sbr.rel (%p394) target = $region56
        $region55: #{tpu_custom_call.1} parent=35 // pred_region
          %v398 = vld [vmem:[%s1] sm:$0xff]
          %v399 = vld [vmem:[%s1 + $0x8] sm:$0xff]
          %v400 = vld [vmem:[%s1 + $0x10] sm:$0xff]
          %v401 = vld [vmem:[%s1 + $0x18] sm:$0xff]
          %v402 = vld [vmem:[%s2] sm:$0x3]
          %v403 = vld [vmem:[#allocation2] sm:$0x3]
          %v404 = vld [vmem:[#allocation3] sm:$0x3]
          %v405 = vmul.f32 %v404, 0.001953125
          %vm406 = vcmask 261120
          %v408 = vsel %vm406, %v403, 0
          %410 = vmatprep.subr.mxu0 0.0
          %411 = vmatpush1.msra.mxu0 0.0
          %412 = vmatprep.subr.mxu0 0.0
          %413 = vmatpush1.msra.mxu0 0.0
          %414 = vmatprep.subr.mxu0 0.0
          %415 = vmatpush1.msra.mxu0 0.0
          %416 = vmatprep.subr.mxu0 0.0
          %417 = vmatpush1.msra.mxu0 0.0
          %418 = vmatprep.subr.mxu0 0.0
          %419 = vmatpush1.msra.mxu0 0.0
          %420 = vmatprep.subr.mxu0 0.0
          %421 = vmatpush1.msra.mxu0 0.0
          %422 = vmatprep.subr.mxu0 0.0
          %423 = vmatpush1.msra.mxu0 0.0
          %424 = vmatprep.subr.mxu0 0.0
          %425 = vmatpush1.msra.mxu0 0.0
          %426 = vmatprep.subr.mxu0 0.0
          %427 = vmatpush1.msra.mxu0 0.0
          %428 = vmatprep.subr.mxu0 0.0
          %429 = vmatpush1.msra.mxu0 0.0
          %430 = vmatprep.subr.mxu0 0.0
          %431 = vmatpush1.msra.mxu0 0.0
          %432 = vmatprep.subr.mxu0 0.0
          %433 = vmatpush1.msra.mxu0 0.0
          %434 = vmatprep.subr.mxu0 0.0
          %435 = vmatpush1.msra.mxu0 %v401
          %436 = vmatprep.subr.mxu0 0.0
          %437 = vmatpush1.msra.mxu0 %v400
          %438 = vmatprep.subr.mxu0 0.0
          %439 = vmatpush1.msra.mxu0 %v399
          %440 = vmatprep.subr.mxu0 0.0
          %441 = vmatpush1.msra.mxu0 %v398
          %442 = vmatprep.subr.mxu0 0.0
          %443 = vmatpush2.msra.mxu0 0.0
          %444 = vmatprep.subr.mxu0 0.0
          %445 = vmatpush2.msra.mxu0 0.0
          %446 = vmatprep.subr.mxu0 0.0
          %447 = vmatpush2.msra.mxu0 0.0
          %448 = vmatprep.subr.mxu0 0.0
          %449 = vmatpush2.msra.mxu0 0.0
          %450 = vmatprep.subr.mxu0 0.0
          %451 = vmatpush2.msra.mxu0 0.0
          %452 = vmatprep.subr.mxu0 0.0
          %453 = vmatpush2.msra.mxu0 0.0
          %454 = vmatprep.subr.mxu0 0.0
          %455 = vmatpush2.msra.mxu0 0.0
          %456 = vmatprep.subr.mxu0 0.0
          %457 = vmatpush2.msra.mxu0 0.0
          %458 = vmatprep.subr.mxu0 0.0
          %459 = vmatpush2.msra.mxu0 0.0
          %460 = vmatprep.subr.mxu0 0.0
          %461 = vmatpush2.msra.mxu0 0.0
          %462 = vmatprep.subr.mxu0 0.0
          %463 = vmatpush2.msra.mxu0 0.0
          %464 = vmatprep.subr.mxu0 0.0
          %465 = vmatpush2.msra.mxu0 0.0
          %466 = vmatprep.subr.mxu0 0.0
          %467 = vmatpush2.msra.mxu0 0.0
          %468 = vmatprep.subr.mxu0 0.0
          %469 = vmatpush2.msra.mxu0 0.0
          %470 = vmatprep.subr.mxu0 0.0
          %471 = vmatpush2.msra.mxu0 0.0
          %472 = vmatprep.subr.mxu0 0.0
          %473 = vmatpush2.msra.mxu0 0.0
          %474 = vmatprep.mubr.f32.mxu0 0.0
          %475 = vmatmul.mubr.f32.gmra.mxu0 %v408
          %v476 = vpop.f32.mrf.mxu0
          %v477 = vadd.f32 0.0, %v476
          %v478 = vpop.f32.mrf.mxu0
          %479 = vdwg.mxu0
          %v480 = vmax.f32 %v477, 0.0
          %v482 = vsel %vm406, %v405, 0
          %484 = vmatprep.subr.mxu0 0.0
          %485 = vmatpush1.msra.mxu0 0.0
          %486 = vmatprep.subr.mxu0 0.0
          %487 = vmatpush1.msra.mxu0 0.0
          %488 = vmatprep.subr.mxu0 0.0
          %489 = vmatpush1.msra.mxu0 0.0
          %490 = vmatprep.subr.mxu0 0.0
          %491 = vmatpush1.msra.mxu0 0.0
          %492 = vmatprep.subr.mxu0 0.0
          %493 = vmatpush1.msra.mxu0 0.0
          %494 = vmatprep.subr.mxu0 0.0
          %495 = vmatpush1.msra.mxu0 0.0
          %496 = vmatprep.subr.mxu0 0.0
          %497 = vmatpush1.msra.mxu0 0.0
          %498 = vmatprep.subr.mxu0 0.0
          %499 = vmatpush1.msra.mxu0 0.0
          %500 = vmatprep.subr.mxu0 0.0
          %501 = vmatpush1.msra.mxu0 0.0
          %502 = vmatprep.subr.mxu0 0.0
          %503 = vmatpush1.msra.mxu0 0.0
          %504 = vmatprep.subr.mxu0 0.0
          %505 = vmatpush1.msra.mxu0 0.0
          %506 = vmatprep.subr.mxu0 0.0
          %507 = vmatpush1.msra.mxu0 0.0
          %508 = vmatprep.subr.mxu0 0.0
          %509 = vmatpush1.msra.mxu0 %v401
          %510 = vmatprep.subr.mxu0 0.0
          %511 = vmatpush1.msra.mxu0 %v400
          %512 = vmatprep.subr.mxu0 0.0
          %513 = vmatpush1.msra.mxu0 %v399
          %514 = vmatprep.subr.mxu0 0.0
          %515 = vmatpush1.msra.mxu0 %v398
          %516 = vmatprep.subr.mxu0 0.0
          %517 = vmatpush2.msra.mxu0 0.0
          %518 = vmatprep.subr.mxu0 0.0
          %519 = vmatpush2.msra.mxu0 0.0
          %520 = vmatprep.subr.mxu0 0.0
          %521 = vmatpush2.msra.mxu0 0.0
          %522 = vmatprep.subr.mxu0 0.0
          %523 = vmatpush2.msra.mxu0 0.0
          %524 = vmatprep.subr.mxu0 0.0
          %525 = vmatpush2.msra.mxu0 0.0
          %526 = vmatprep.subr.mxu0 0.0
          %527 = vmatpush2.msra.mxu0 0.0
          %528 = vmatprep.subr.mxu0 0.0
          %529 = vmatpush2.msra.mxu0 0.0
          %530 = vmatprep.subr.mxu0 0.0
          %531 = vmatpush2.msra.mxu0 0.0
          %532 = vmatprep.subr.mxu0 0.0
          %533 = vmatpush2.msra.mxu0 0.0
          %534 = vmatprep.subr.mxu0 0.0
          %535 = vmatpush2.msra.mxu0 0.0
          %536 = vmatprep.subr.mxu0 0.0
          %537 = vmatpush2.msra.mxu0 0.0
          %538 = vmatprep.subr.mxu0 0.0
          %539 = vmatpush2.msra.mxu0 0.0
          %540 = vmatprep.subr.mxu0 0.0
          %541 = vmatpush2.msra.mxu0 0.0
          %542 = vmatprep.subr.mxu0 0.0
          %543 = vmatpush2.msra.mxu0 0.0
          %544 = vmatprep.subr.mxu0 0.0
          %545 = vmatpush2.msra.mxu0 0.0
          %546 = vmatprep.subr.mxu0 0.0
          %547 = vmatpush2.msra.mxu0 0.0
          %548 = vmatprep.mubr.f32.mxu0 0.0
          %549 = vmatmul.mubr.f32.gmra.mxu0 %v482
          %v550 = vpop.f32.mrf.mxu0
          %v551 = vadd.f32 0.0, %v550
          %v552 = vpop.f32.mrf.mxu0
          %553 = vdwg.mxu0
          %v554 = vmax.f32 %v551, 0.0
          %vm555 = vcmask 15360
          %v557 = vsel %vm555, %v554, 0
          %vm559 = vcmask 1041408
          %v561 = vsel %vm559, %v402, 0
          %563 = vmatprep.subr.mxu0 0.0
          %564 = vmatpush1.msra.mxu0 0.0
          %565 = vmatprep.subr.mxu0 0.0
          %566 = vmatpush1.msra.mxu0 0.0
          %567 = vmatprep.subr.mxu0 0.0
          %568 = vmatpush1.msra.mxu0 0.0
          %569 = vmatprep.subr.mxu0 0.0
          %570 = vmatpush1.msra.mxu0 0.0
          %571 = vmatprep.subr.mxu0 0.0
          %572 = vmatpush1.msra.mxu0 0.0
          %573 = vmatprep.subr.mxu0 0.0
          %574 = vmatpush1.msra.mxu0 0.0
          %575 = vmatprep.subr.mxu0 0.0
          %576 = vmatpush1.msra.mxu0 0.0
          %577 = vmatprep.subr.mxu0 0.0
          %578 = vmatpush1.msra.mxu0 0.0
          %579 = vmatprep.subr.mxu0 0.0
          %580 = vmatpush1.msra.mxu0 0.0
          %581 = vmatprep.subr.mxu0 0.0
          %582 = vmatpush1.msra.mxu0 0.0
          %583 = vmatprep.subr.mxu0 0.0
          %584 = vmatpush1.msra.mxu0 0.0
          %585 = vmatprep.subr.mxu0 0.0
          %586 = vmatpush1.msra.mxu0 0.0
          %587 = vmatprep.subr.mxu0 0.0
          %588 = vmatpush1.msra.mxu0 0.0
          %589 = vmatprep.subr.mxu0 0.0
          %590 = vmatpush1.msra.mxu0 0.0
          %591 = vmatprep.subr.mxu0 0.0
          %592 = vmatpush1.msra.mxu0 0.0
          %593 = vmatprep.subr.mxu0 0.0
          %594 = vmatpush1.msra.mxu0 %v561
          %595 = vmatprep.subr.mxu0 0.0
          %596 = vmatpush2.msra.mxu0 0.0
          %597 = vmatprep.subr.mxu0 0.0
          %598 = vmatpush2.msra.mxu0 0.0
          %599 = vmatprep.subr.mxu0 0.0
          %600 = vmatpush2.msra.mxu0 0.0
          %601 = vmatprep.subr.mxu0 0.0
          %602 = vmatpush2.msra.mxu0 0.0
          %603 = vmatprep.subr.mxu0 0.0
          %604 = vmatpush2.msra.mxu0 0.0
          %605 = vmatprep.subr.mxu0 0.0
          %606 = vmatpush2.msra.mxu0 0.0
          %607 = vmatprep.subr.mxu0 0.0
          %608 = vmatpush2.msra.mxu0 0.0
          %609 = vmatprep.subr.mxu0 0.0
          %610 = vmatpush2.msra.mxu0 0.0
          %611 = vmatprep.subr.mxu0 0.0
          %612 = vmatpush2.msra.mxu0 0.0
          %613 = vmatprep.subr.mxu0 0.0
          %614 = vmatpush2.msra.mxu0 0.0
          %615 = vmatprep.subr.mxu0 0.0
          %616 = vmatpush2.msra.mxu0 0.0
          %617 = vmatprep.subr.mxu0 0.0
          %618 = vmatpush2.msra.mxu0 0.0
          %619 = vmatprep.subr.mxu0 0.0
          %620 = vmatpush2.msra.mxu0 0.0
          %621 = vmatprep.subr.mxu0 0.0
          %622 = vmatpush2.msra.mxu0 0.0
          %623 = vmatprep.subr.mxu0 0.0
          %624 = vmatpush2.msra.mxu0 0.0
          %625 = vmatprep.subr.mxu0 0.0
          %626 = vmatpush2.msra.mxu0 0.0
          %627 = vmatprep.mubr.f32.mxu0 0.0
          %628 = vmatmul.mubr.f32.gmra.mxu0 %v557
          %v629 = vpop.f32.mrf.mxu0
          %v630 = vadd.f32 0.0, %v629
          %v631 = vpop.f32.mrf.mxu0
          %632 = vdwg.mxu0
          %v634 = vsel %vm555, %v480, 0
          %636 = vmatprep.subr.mxu0 0.0
          %637 = vmatpush1.msra.mxu0 0.0
          %638 = vmatprep.subr.mxu0 0.0
          %639 = vmatpush1.msra.mxu0 0.0
          %640 = vmatprep.subr.mxu0 0.0
          %641 = vmatpush1.msra.mxu0 0.0
          %642 = vmatprep.subr.mxu0 0.0
          %643 = vmatpush1.msra.mxu0 0.0
          %644 = vmatprep.subr.mxu0 0.0
          %645 = vmatpush1.msra.mxu0 0.0
          %646 = vmatprep.subr.mxu0 0.0
          %647 = vmatpush1.msra.mxu0 0.0
          %648 = vmatprep.subr.mxu0 0.0
          %649 = vmatpush1.msra.mxu0 0.0
          %650 = vmatprep.subr.mxu0 0.0
          %651 = vmatpush1.msra.mxu0 0.0
          %652 = vmatprep.subr.mxu0 0.0
          %653 = vmatpush1.msra.mxu0 0.0
          %654 = vmatprep.subr.mxu0 0.0
          %655 = vmatpush1.msra.mxu0 0.0
          %656 = vmatprep.subr.mxu0 0.0
          %657 = vmatpush1.msra.mxu0 0.0
          %658 = vmatprep.subr.mxu0 0.0
          %659 = vmatpush1.msra.mxu0 0.0
          %660 = vmatprep.subr.mxu0 0.0
          %661 = vmatpush1.msra.mxu0 0.0
          %662 = vmatprep.subr.mxu0 0.0
          %663 = vmatpush1.msra.mxu0 0.0
          %664 = vmatprep.subr.mxu0 0.0
          %665 = vmatpush1.msra.mxu0 0.0
          %666 = vmatprep.subr.mxu0 0.0
          %667 = vmatpush1.msra.mxu0 %v561
          %668 = vmatprep.subr.mxu0 0.0
          %669 = vmatpush2.msra.mxu0 0.0
          %670 = vmatprep.subr.mxu0 0.0
          %671 = vmatpush2.msra.mxu0 0.0
          %672 = vmatprep.subr.mxu0 0.0
          %673 = vmatpush2.msra.mxu0 0.0
          %674 = vmatprep.subr.mxu0 0.0
          %675 = vmatpush2.msra.mxu0 0.0
          %676 = vmatprep.subr.mxu0 0.0
          %677 = vmatpush2.msra.mxu0 0.0
          %678 = vmatprep.subr.mxu0 0.0
          %679 = vmatpush2.msra.mxu0 0.0
          %680 = vmatprep.subr.mxu0 0.0
          %681 = vmatpush2.msra.mxu0 0.0
          %682 = vmatprep.subr.mxu0 0.0
          %683 = vmatpush2.msra.mxu0 0.0
          %684 = vmatprep.subr.mxu0 0.0
          %685 = vmatpush2.msra.mxu0 0.0
          %686 = vmatprep.subr.mxu0 0.0
          %687 = vmatpush2.msra.mxu0 0.0
          %688 = vmatprep.subr.mxu0 0.0
          %689 = vmatpush2.msra.mxu0 0.0
          %690 = vmatprep.subr.mxu0 0.0
          %691 = vmatpush2.msra.mxu0 0.0
          %692 = vmatprep.subr.mxu0 0.0
          %693 = vmatpush2.msra.mxu0 0.0
          %694 = vmatprep.subr.mxu0 0.0
          %695 = vmatpush2.msra.mxu0 0.0
          %696 = vmatprep.subr.mxu0 0.0
          %697 = vmatpush2.msra.mxu0 0.0
          %698 = vmatprep.subr.mxu0 0.0
          %699 = vmatpush2.msra.mxu0 0.0
          %700 = vmatprep.mubr.f32.mxu0 0.0
          %701 = vmatmul.mubr.f32.gmra.mxu0 %v634
          %v702 = vpop.f32.mrf.mxu0
          %v703 = vadd.f32 %v630, %v702
          %v704 = vpop.f32.mrf.mxu0
          %705 = vdwg.mxu0
          %v706 = vxor.u32 %v703, 2147483648
          %v707 = vmul.f32 %v706, 1.442695
          %v708 = vpow.pop %v707
          %v709 = vadd.f32 %v708, 1.0
          %v710 = vrcp.pop %v709
          %v711 = vmul.f32 1.0, %v710
          %v712 = vlaneseq
          %v713 = vshrl.u32 %v712, 7
          %v714 = vsub.s32 0, %v713
          %v715 = vrot.slane %v711, %v714
          %717 = vbcast.lane.b32.xlu0 %v715, 256
          %v718 = vpop.permute.xlu0 %717
          %s720 = sor.u32 256, 8
          %721 = vbcast.lane.b32.xlu0 %v715, %s720
          %v722 = vpop.permute.xlu0 %721
          %s724 = sor.u32 256, 16
          %725 = vbcast.lane.b32.xlu0 %v715, %s724
          %v726 = vpop.permute.xlu0 %725
          %s728 = sor.u32 256, 24
          %729 = vbcast.lane.b32.xlu0 %v715, %s728
          %v730 = vpop.permute.xlu0 %729
          %v731 = vlaneseq
          %v732 = vshrl.u32 %v731, 7
          %v733 = vsub.s32 1, %v732
          %v734 = vrot.slane %v711, %v733
          %736 = vbcast.lane.b32.xlu0 %v734, 256
          %v737 = vpop.permute.xlu0 %736
          %s739 = sor.u32 256, 8
          %740 = vbcast.lane.b32.xlu0 %v734, %s739
          %v741 = vpop.permute.xlu0 %740
          %s743 = sor.u32 256, 16
          %744 = vbcast.lane.b32.xlu0 %v734, %s743
          %v745 = vpop.permute.xlu0 %744
          %s747 = sor.u32 256, 24
          %748 = vbcast.lane.b32.xlu0 %v734, %s747
          %v749 = vpop.permute.xlu0 %748
          %vm750 = vcmask 7168
          %751 = vst.msk [vmem:[#allocation4] sm:$0xff] %vm750, %v718
          %752 = vst.msk [vmem:[#allocation4 + $0x8] sm:$0xff] %vm750, %v722
          %753 = vst.msk [vmem:[#allocation4 + $0x10] sm:$0xff] %vm750, %v726
          %754 = vst.msk [vmem:[#allocation4 + $0x18] sm:$0xff] %vm750, %v730
          %755 = vst.msk [vmem:[#allocation4 + $0x20] sm:$0xff] %vm750, %v737
          %756 = vst.msk [vmem:[#allocation4 + $0x28] sm:$0xff] %vm750, %v741
          %757 = vst.msk [vmem:[#allocation4 + $0x30] sm:$0xff] %vm750, %v745
          %758 = vst.msk [vmem:[#allocation4 + $0x38] sm:$0xff] %vm750, %v749
        $region56: #{tpu_custom_call.1} parent=35 // pred_fallthru
          _
        // Predicated region
        $region57: #{tpu_custom_call.1} parent=35 // pred_check
          %p759 = pneg %p393
        $region58: #{tpu_custom_call.1} parent=35 // pred_check_branch
          %761 = sbr.rel (%p759) target = $region60
        $region59: #{tpu_custom_call.1} parent=35 // pred_region
          %v762 = vld [vmem:[%s204] sm:$0xff]
          %v763 = vld [vmem:[%s204 + $0x8] sm:$0xff]
          %v764 = vld [vmem:[%s204 + $0x10] sm:$0xff]
          %v765 = vld [vmem:[%s204 + $0x18] sm:$0xff]
          %v766 = vld [vmem:[%s204 + $0x20] sm:$0xff]
          %v767 = vld [vmem:[%s204 + $0x28] sm:$0xff]
          %v768 = vld [vmem:[%s204 + $0x30] sm:$0xff]
          %v769 = vld [vmem:[%s204 + $0x38] sm:$0xff]
          %v770 = vld [vmem:[#allocation4] sm:$0xff]
          %v771 = vld [vmem:[#allocation4 + $0x8] sm:$0xff]
          %v772 = vld [vmem:[#allocation4 + $0x10] sm:$0xff]
          %v773 = vld [vmem:[#allocation4 + $0x18] sm:$0xff]
          %v774 = vld [vmem:[#allocation4 + $0x20] sm:$0xff]
          %v775 = vld [vmem:[#allocation4 + $0x28] sm:$0xff]
          %v776 = vld [vmem:[#allocation4 + $0x30] sm:$0xff]
          %v777 = vld [vmem:[#allocation4 + $0x38] sm:$0xff]
          %779 = vset.pattern.permute.xlu0 0
          %780 = vperm.xlu0 %779, %v770
          %v781 = vpop.permute.xlu0 %780
          %784 = vset.pattern.permute.xlu0 0
          %785 = vperm.xlu0 %784, %v771
          %v786 = vpop.permute.xlu0 %785
          %789 = vset.pattern.permute.xlu0 0
          %790 = vperm.xlu0 %789, %v772
          %v791 = vpop.permute.xlu0 %790
          %794 = vset.pattern.permute.xlu0 0
          %795 = vperm.xlu0 %794, %v773
          %v796 = vpop.permute.xlu0 %795
          %799 = vset.pattern.permute.xlu0 0
          %800 = vperm.xlu0 %799, %v774
          %v801 = vpop.permute.xlu0 %800
          %804 = vset.pattern.permute.xlu0 0
          %805 = vperm.xlu0 %804, %v775
          %v806 = vpop.permute.xlu0 %805
          %809 = vset.pattern.permute.xlu0 0
          %810 = vperm.xlu0 %809, %v776
          %v811 = vpop.permute.xlu0 %810
          %814 = vset.pattern.permute.xlu0 0
          %815 = vperm.xlu0 %814, %v777
          %v816 = vpop.permute.xlu0 %815
          %v818 = vmul.f32 %v762, %v781
          %v819 = vmul.f32 %v763, %v786
          %v820 = vmul.f32 %v764, %v791
          %v821 = vmul.f32 %v765, %v796
          %v822 = vmul.f32 %v766, %v801
          %v823 = vmul.f32 %v767, %v806
          %v824 = vmul.f32 %v768, %v811
          %v825 = vmul.f32 %v769, %v816
          %s826 = smul.u32 %s25, 128
          %v827 = vmax.f32 %v818, %v820
          %v828 = vmax.f32 %v819, %v821
          %v829 = vmax.f32 %v827, %v828
          %v830 = vrot.slane %v829, 4
          %v831 = vmax.f32 %v829, %v830
          %v832 = vrot.slane %v831, 2
          %v833 = vmax.f32 %v831, %v832
          %v834 = vrot.slane %v833, 1
          %v835 = vmax.f32 %v833, %v834
          %v836 = vmax.f32 %v822, %v824
          %v837 = vmax.f32 %v823, %v825
          %v838 = vmax.f32 %v836, %v837
          %v839 = vrot.slane %v838, 4
          %v840 = vmax.f32 %v838, %v839
          %v841 = vrot.slane %v840, 2
          %v842 = vmax.f32 %v840, %v841
          %v843 = vrot.slane %v842, 1
          %v844 = vmax.f32 %v842, %v843
          %v848 = vunpack.c.l.s4 1983009808
          %v849 = vunpack.c.0.s8 %v848
          %v850 = vlaneseq
          %v851 = vshrl.u32 %v850, 7
          %v852 = vsub.s32 %v849, %v851
          %v853 = vrot.slane %v835, %v852
          %v855 = vunpack.c.l.s4 1983009808
          %v856 = vunpack.c.0.s8 %v855
          %v857 = vlaneseq
          %v858 = vshrl.u32 %v857, 7
          %v859 = vsub.s32 %v856, %v858
          %v860 = vrot.slane %v844, %v859
          %vm861 = vcmask 1044484
          %v862 = vsel %vm861, %v853, %v853
          %vm863 = vcmask 1046534
          %v864 = vsel %vm863, %v853, %v862
          %v865 = vrot.slane %v860, 7
          %vm866 = vcmask 1041409
          %v867 = vsel %vm866, %v865, %v864
          %vm868 = vcmask 1043459
          %v869 = vsel %vm868, %v865, %v867
          %vm870 = vcmask 1045509
          %v871 = vsel %vm870, %v865, %v869
          %vm872 = vcmask 1047559
          %v873 = vsel %vm872, %v865, %v871
          %s875 = sshra.s32 %s826, 7
          %s876 = sand.u32 %s826, 127
          %s877 = smul.addr %s875, 2
          %s878 = scalar_lea.vmem [#allocation5], %s877
          %879 = vst [vmem:[%s878] sm:$0x3] %v873
          %v880 = vadd.f32 %v818, %v819
          %v881 = vadd.f32 %v880, %v820
          %v882 = vadd.f32 %v881, %v821
          %v883 = vrot.slane %v882, 4
          %v884 = vadd.f32 %v882, %v883
          %v885 = vrot.slane %v884, 2
          %v886 = vadd.f32 %v884, %v885
          %v887 = vrot.slane %v886, 1
          %v888 = vadd.f32 %v886, %v887
          %v889 = vadd.f32 %v822, %v823
          %v890 = vadd.f32 %v889, %v824
          %v891 = vadd.f32 %v890, %v825
          %v892 = vrot.slane %v891, 4
          %v893 = vadd.f32 %v891, %v892
          %v894 = vrot.slane %v893, 2
          %v895 = vadd.f32 %v893, %v894
          %v896 = vrot.slane %v895, 1
          %v897 = vadd.f32 %v895, %v896
          %v898 = vrcp.pop 32.0
          %v899 = vmul.f32 %v888, %v898
          %v900 = vmul.f32 %v897, %v898
          %v904 = vunpack.c.l.s4 1983009808
          %v905 = vunpack.c.0.s8 %v904
          %v906 = vlaneseq
          %v907 = vshrl.u32 %v906, 7
          %v908 = vsub.s32 %v905, %v907
          %v909 = vrot.slane %v899, %v908
          %v911 = vunpack.c.l.s4 1983009808
          %v912 = vunpack.c.0.s8 %v911
          %v913 = vlaneseq
          %v914 = vshrl.u32 %v913, 7
          %v915 = vsub.s32 %v912, %v914
          %v916 = vrot.slane %v900, %v915
          %v917 = vsel %vm861, %v909, %v909
          %v918 = vsel %vm863, %v909, %v917
          %v919 = vrot.slane %v916, 7
          %v920 = vsel %vm866, %v919, %v918
          %v921 = vsel %vm868, %v919, %v920
          %v922 = vsel %vm870, %v919, %v921
          %v923 = vsel %vm872, %v919, %v922
          %s925 = smul.addr %s875, 2
          %s926 = scalar_lea.vmem [#allocation6], %s925
          %927 = vst [vmem:[%s926] sm:$0x3] %v923
        $region60: #{tpu_custom_call.1} parent=35 // pred_fallthru
          _
        %p928 = scmp.eq.s32.totalorder %s25, 3
        %p929 = pnand %p393, %p928
        %p930 = pneg %p929
        // Predicated region
        $region61: #{tpu_custom_call.1} parent=35 // pred_check
          _
        $region62: #{tpu_custom_call.1} parent=35 // pred_check_branch
          %932 = sbr.rel (%p929) target = $region64
        $region63: #{tpu_custom_call.1} parent=35 // pred_region
          %v933 = vld [vmem:[#allocation5] sm:$0xff]
          %v934 = vld [vmem:[#allocation6] sm:$0xff]
          %s935 = sld [smem:[#allocation11]]
          %v937 = vcombine.high %v933, %v933
          %v939 = vunpack.c.l.s4 1983009808
          %v940 = vunpack.c.0.s8 %v939
          %v941 = vlaneseq
          %v942 = vshrl.u32 %v941, 7
          %v943 = vsub.s32 %v940, %v942
          %v944 = vrot.slane %v933, %v943
          %v946 = vunpack.c.l.s4 1983009808
          %v947 = vunpack.c.0.s8 %v946
          %v948 = vlaneseq
          %v949 = vshrl.u32 %v948, 7
          %v950 = vsub.s32 %v947, %v949
          %v951 = vrot.slane %v937, %v950
          %v952 = vcombine.high %v944, %v944
          %v953 = vcombine.high %v951, %v951
          %954 = vrot.lane.b32.xlu0 %v944, 3
          %v955 = vpop.permute.xlu0 %954
          %956 = vrot.lane.b32.xlu0 %v952, 3
          %v957 = vpop.permute.xlu0 %956
          %958 = vrot.lane.b32.xlu0 %v951, 3
          %v959 = vpop.permute.xlu0 %958
          %960 = vrot.lane.b32.xlu0 %v953, 3
          %v961 = vpop.permute.xlu0 %960
          %vm962 = vcmask 23552
          %v963 = vsel %vm962, %v955, %v957
          %v964 = vsel %vm962, %v957, %v959
          %v965 = vsel %vm962, %v959, %v961
          %v970 = vsel %vm962, 0.0, %v955
          %v971 = vstv %s935
          %v972 = vmul.f32 %v971, %v970
          %v973 = vmul.f32 %v971, %v963
          %v974 = vmul.f32 %v971, %v964
          %v975 = vmul.f32 %v971, %v965
          %v976 = vadd.f32 %v972, 0.0
          %v977 = vadd.f32 %v973, 0.0
          %v978 = vadd.f32 %v974, 0.0
          %v979 = vadd.f32 %v975, 0.0
          %s980 = sld [smem:[#allocation11 + $0x7]]
          %v982 = vcombine.high %v934, %v934
          %v984 = vunpack.c.l.s4 1983009808
          %v985 = vunpack.c.0.s8 %v984
          %v986 = vlaneseq
          %v987 = vshrl.u32 %v986, 7
          %v988 = vsub.s32 %v985, %v987
          %v989 = vrot.slane %v934, %v988
          %v991 = vunpack.c.l.s4 1983009808
          %v992 = vunpack.c.0.s8 %v991
          %v993 = vlaneseq
          %v994 = vshrl.u32 %v993, 7
          %v995 = vsub.s32 %v992, %v994
          %v996 = vrot.slane %v982, %v995
          %v997 = vcombine.high %v989, %v989
          %v998 = vcombine.high %v996, %v996
          %999 = vrot.lane.b32.xlu0 %v989, 3
          %v1000 = vpop.permute.xlu0 %999
          %1001 = vrot.lane.b32.xlu0 %v997, 3
          %v1002 = vpop.permute.xlu0 %1001
          %1003 = vrot.lane.b32.xlu0 %v996, 3
          %v1004 = vpop.permute.xlu0 %1003
          %1005 = vrot.lane.b32.xlu0 %v998, 3
          %v1006 = vpop.permute.xlu0 %1005
          %v1007 = vsel %vm962, %v1000, %v1002
          %v1008 = vsel %vm962, %v1002, %v1004
          %v1009 = vsel %vm962, %v1004, %v1006
          %v1014 = vsel %vm962, 0.0, %v1000
          %v1015 = vstv %s980
          %v1016 = vmul.f32 %v1015, %v1014
          %v1017 = vmul.f32 %v1015, %v1007
          %v1018 = vmul.f32 %v1015, %v1008
          %v1019 = vmul.f32 %v1015, %v1009
          %v1020 = vadd.f32 %v976, %v1016
          %v1021 = vadd.f32 %v977, %v1017
          %v1022 = vadd.f32 %v978, %v1018
          %v1023 = vadd.f32 %v979, %v1019
          %s1024 = sld [smem:[#allocation11 + $0x1]]
          %1025 = vrot.lane.b32.xlu0 %v944, 2
          %v1026 = vpop.permute.xlu0 %1025
          %1027 = vrot.lane.b32.xlu0 %v952, 2
          %v1028 = vpop.permute.xlu0 %1027
          %1029 = vrot.lane.b32.xlu0 %v951, 2
          %v1030 = vpop.permute.xlu0 %1029
          %1031 = vrot.lane.b32.xlu0 %v953, 2
          %v1032 = vpop.permute.xlu0 %1031
          %vm1033 = vcmask 15360
          %v1034 = vsel %vm1033, %v1026, %v1028
          %v1035 = vsel %vm1033, %v1028, %v1030
          %v1036 = vsel %vm1033, %v1030, %v1032
          %v1041 = vsel %vm1033, 0.0, %v1026
          %v1042 = vstv %s1024
          %v1043 = vmul.f32 %v1042, %v1041
          %v1044 = vmul.f32 %v1042, %v1034
          %v1045 = vmul.f32 %v1042, %v1035
          %v1046 = vmul.f32 %v1042, %v1036
          %v1047 = vadd.f32 %v1020, %v1043
          %v1048 = vadd.f32 %v1021, %v1044
          %v1049 = vadd.f32 %v1022, %v1045
          %v1050 = vadd.f32 %v1023, %v1046
          %s1051 = sld [smem:[#allocation11 + $0x8]]
          %1052 = vrot.lane.b32.xlu0 %v989, 2
          %v1053 = vpop.permute.xlu0 %1052
          %1054 = vrot.lane.b32.xlu0 %v997, 2
          %v1055 = vpop.permute.xlu0 %1054
          %1056 = vrot.lane.b32.xlu0 %v996, 2
          %v1057 = vpop.permute.xlu0 %1056
          %1058 = vrot.lane.b32.xlu0 %v998, 2
          %v1059 = vpop.permute.xlu0 %1058
          %v1060 = vsel %vm1033, %v1053, %v1055
          %v1061 = vsel %vm1033, %v1055, %v1057
          %v1062 = vsel %vm1033, %v1057, %v1059
          %v1067 = vsel %vm1033, 0.0, %v1053
          %v1068 = vstv %s1051
          %v1069 = vmul.f32 %v1068, %v1067
          %v1070 = vmul.f32 %v1068, %v1060
          %v1071 = vmul.f32 %v1068, %v1061
          %v1072 = vmul.f32 %v1068, %v1062
          %v1073 = vadd.f32 %v1047, %v1069
          %v1074 = vadd.f32 %v1048, %v1070
          %v1075 = vadd.f32 %v1049, %v1071
          %v1076 = vadd.f32 %v1050, %v1072
          %s1077 = sld [smem:[#allocation11 + $0x2]]
          %1078 = vrot.lane.b32.xlu0 %v944, 1
          %v1079 = vpop.permute.xlu0 %1078
          %1080 = vrot.lane.b32.xlu0 %v952, 1
          %v1081 = vpop.permute.xlu0 %1080
          %1082 = vrot.lane.b32.xlu0 %v951, 1
          %v1083 = vpop.permute.xlu0 %1082
          %1084 = vrot.lane.b32.xlu0 %v953, 1
          %v1085 = vpop.permute.xlu0 %1084
          %vm1086 = vcmask 7168
          %v1087 = vsel %vm1086, %v1079, %v1081
          %v1088 = vsel %vm1086, %v1081, %v1083
          %v1089 = vsel %vm1086, %v1083, %v1085
          %v1094 = vsel %vm1086, 0.0, %v1079
          %v1095 = vstv %s1077
          %v1096 = vmul.f32 %v1095, %v1094
          %v1097 = vmul.f32 %v1095, %v1087
          %v1098 = vmul.f32 %v1095, %v1088
          %v1099 = vmul.f32 %v1095, %v1089
          %v1100 = vadd.f32 %v1073, %v1096
          %v1101 = vadd.f32 %v1074, %v1097
          %v1102 = vadd.f32 %v1075, %v1098
          %v1103 = vadd.f32 %v1076, %v1099
          %s1104 = sld [smem:[#allocation11 + $0x9]]
          %1105 = vrot.lane.b32.xlu0 %v989, 1
          %v1106 = vpop.permute.xlu0 %1105
          %1107 = vrot.lane.b32.xlu0 %v997, 1
          %v1108 = vpop.permute.xlu0 %1107
          %1109 = vrot.lane.b32.xlu0 %v996, 1
          %v1110 = vpop.permute.xlu0 %1109
          %1111 = vrot.lane.b32.xlu0 %v998, 1
          %v1112 = vpop.permute.xlu0 %1111
          %v1113 = vsel %vm1086, %v1106, %v1108
          %v1114 = vsel %vm1086, %v1108, %v1110
          %v1115 = vsel %vm1086, %v1110, %v1112
          %v1120 = vsel %vm1086, 0.0, %v1106
          %v1121 = vstv %s1104
          %v1122 = vmul.f32 %v1121, %v1120
          %v1123 = vmul.f32 %v1121, %v1113
          %v1124 = vmul.f32 %v1121, %v1114
          %v1125 = vmul.f32 %v1121, %v1115
          %v1126 = vadd.f32 %v1100, %v1122
          %v1127 = vadd.f32 %v1101, %v1123
          %v1128 = vadd.f32 %v1102, %v1124
          %v1129 = vadd.f32 %v1103, %v1125
          %s1130 = sld [smem:[#allocation11 + $0x3]]
          %v1131 = vstv %s1130
          %v1132 = vmul.f32 %v1131, %v933
          %v1134 = vcombine.high %v1132, %v1132
          %v1136 = vunpack.c.l.s4 1983009808
          %v1137 = vunpack.c.0.s8 %v1136
          %v1138 = vlaneseq
          %v1139 = vshrl.u32 %v1138, 7
          %v1140 = vsub.s32 %v1137, %v1139
          %v1141 = vrot.slane %v1132, %v1140
          %v1143 = vunpack.c.l.s4 1983009808
          %v1144 = vunpack.c.0.s8 %v1143
          %v1145 = vlaneseq
          %v1146 = vshrl.u32 %v1145, 7
          %v1147 = vsub.s32 %v1144, %v1146
          %v1148 = vrot.slane %v1134, %v1147
          %v1149 = vcombine.high %v1141, %v1141
          %v1150 = vcombine.high %v1148, %v1148
          %v1155 = vadd.f32 %v1126, %v1141
          %v1156 = vadd.f32 %v1127, %v1149
          %v1157 = vadd.f32 %v1128, %v1148
          %v1158 = vadd.f32 %v1129, %v1150
          %s1159 = sld [smem:[#allocation11 + $0xa]]
          %v1160 = vstv %s1159
          %v1161 = vmul.f32 %v1160, %v934
          %v1163 = vcombine.high %v1161, %v1161
          %v1165 = vunpack.c.l.s4 1983009808
          %v1166 = vunpack.c.0.s8 %v1165
          %v1167 = vlaneseq
          %v1168 = vshrl.u32 %v1167, 7
          %v1169 = vsub.s32 %v1166, %v1168
          %v1170 = vrot.slane %v1161, %v1169
          %v1172 = vunpack.c.l.s4 1983009808
          %v1173 = vunpack.c.0.s8 %v1172
          %v1174 = vlaneseq
          %v1175 = vshrl.u32 %v1174, 7
          %v1176 = vsub.s32 %v1173, %v1175
          %v1177 = vrot.slane %v1163, %v1176
          %v1178 = vcombine.high %v1170, %v1170
          %v1179 = vcombine.high %v1177, %v1177
          %v1184 = vadd.f32 %v1155, %v1170
          %v1185 = vadd.f32 %v1156, %v1178
          %v1186 = vadd.f32 %v1157, %v1177
          %v1187 = vadd.f32 %v1158, %v1179
          %s1188 = sld [smem:[#allocation11 + $0x4]]
          %1189 = vrot.lane.b32.xlu0 %v944, 127
          %v1190 = vpop.permute.xlu0 %1189
          %1191 = vrot.lane.b32.xlu0 %v952, 127
          %v1192 = vpop.permute.xlu0 %1191
          %1193 = vrot.lane.b32.xlu0 %v951, 127
          %v1194 = vpop.permute.xlu0 %1193
          %1195 = vrot.lane.b32.xlu0 %v953, 127
          %v1196 = vpop.permute.xlu0 %1195
          %vm1197 = vcmask 1039360
          %v1198 = vsel %vm1197, %v1190, %v1192
          %v1199 = vsel %vm1197, %v1192, %v1194
          %v1200 = vsel %vm1197, %v1194, %v1196
          %v1205 = vsel %vm1197, %v1196, 0.0
          %v1206 = vstv %s1188
          %v1207 = vmul.f32 %v1206, %v1198
          %v1208 = vmul.f32 %v1206, %v1199
          %v1209 = vmul.f32 %v1206, %v1200
          %v1210 = vmul.f32 %v1206, %v1205
          %v1211 = vadd.f32 %v1184, %v1207
          %v1212 = vadd.f32 %v1185, %v1208
          %v1213 = vadd.f32 %v1186, %v1209
          %v1214 = vadd.f32 %v1187, %v1210
          %s1215 = sld [smem:[#allocation11 + $0xb]]
          %1216 = vrot.lane.b32.xlu0 %v989, 127
          %v1217 = vpop.permute.xlu0 %1216
          %1218 = vrot.lane.b32.xlu0 %v997, 127
          %v1219 = vpop.permute.xlu0 %1218
          %1220 = vrot.lane.b32.xlu0 %v996, 127
          %v1221 = vpop.permute.xlu0 %1220
          %1222 = vrot.lane.b32.xlu0 %v998, 127
          %v1223 = vpop.permute.xlu0 %1222
          %v1224 = vsel %vm1197, %v1217, %v1219
          %v1225 = vsel %vm1197, %v1219, %v1221
          %v1226 = vsel %vm1197, %v1221, %v1223
          %v1231 = vsel %vm1197, %v1223, 0.0
          %v1232 = vstv %s1215
          %v1233 = vmul.f32 %v1232, %v1224
          %v1234 = vmul.f32 %v1232, %v1225
          %v1235 = vmul.f32 %v1232, %v1226
          %v1236 = vmul.f32 %v1232, %v1231
          %v1237 = vadd.f32 %v1211, %v1233
          %v1238 = vadd.f32 %v1212, %v1234
          %v1239 = vadd.f32 %v1213, %v1235
          %v1240 = vadd.f32 %v1214, %v1236
          %s1241 = sld [smem:[#allocation11 + $0x5]]
          %1242 = vrot.lane.b32.xlu0 %v944, 126
          %v1243 = vpop.permute.xlu0 %1242
          %1244 = vrot.lane.b32.xlu0 %v952, 126
          %v1245 = vpop.permute.xlu0 %1244
          %1246 = vrot.lane.b32.xlu0 %v951, 126
          %v1247 = vpop.permute.xlu0 %1246
          %1248 = vrot.lane.b32.xlu0 %v953, 126
          %v1249 = vpop.permute.xlu0 %1248
          %vm1250 = vcmask 1031168
          %v1251 = vsel %vm1250, %v1243, %v1245
          %v1252 = vsel %vm1250, %v1245, %v1247
          %v1253 = vsel %vm1250, %v1247, %v1249
          %v1258 = vsel %vm1250, %v1249, 0.0
          %v1259 = vstv %s1241
          %v1260 = vmul.f32 %v1259, %v1251
          %v1261 = vmul.f32 %v1259, %v1252
          %v1262 = vmul.f32 %v1259, %v1253
          %v1263 = vmul.f32 %v1259, %v1258
          %v1264 = vadd.f32 %v1237, %v1260
          %v1265 = vadd.f32 %v1238, %v1261
          %v1266 = vadd.f32 %v1239, %v1262
          %v1267 = vadd.f32 %v1240, %v1263
          %s1268 = sld [smem:[#allocation11 + $0xc]]
          %1269 = vrot.lane.b32.xlu0 %v989, 126
          %v1270 = vpop.permute.xlu0 %1269
          %1271 = vrot.lane.b32.xlu0 %v997, 126
          %v1272 = vpop.permute.xlu0 %1271
          %1273 = vrot.lane.b32.xlu0 %v996, 126
          %v1274 = vpop.permute.xlu0 %1273
          %1275 = vrot.lane.b32.xlu0 %v998, 126
          %v1276 = vpop.permute.xlu0 %1275
          %v1277 = vsel %vm1250, %v1270, %v1272
          %v1278 = vsel %vm1250, %v1272, %v1274
          %v1279 = vsel %vm1250, %v1274, %v1276
          %v1284 = vsel %vm1250, %v1276, 0.0
          %v1285 = vstv %s1268
          %v1286 = vmul.f32 %v1285, %v1277
          %v1287 = vmul.f32 %v1285, %v1278
          %v1288 = vmul.f32 %v1285, %v1279
          %v1289 = vmul.f32 %v1285, %v1284
          %v1290 = vadd.f32 %v1264, %v1286
          %v1291 = vadd.f32 %v1265, %v1287
          %v1292 = vadd.f32 %v1266, %v1288
          %v1293 = vadd.f32 %v1267, %v1289
          %s1294 = sld [smem:[#allocation11 + $0x6]]
          %1295 = vrot.lane.b32.xlu0 %v944, 125
          %v1296 = vpop.permute.xlu0 %1295
          %1297 = vrot.lane.b32.xlu0 %v952, 125
          %v1298 = vpop.permute.xlu0 %1297
          %1299 = vrot.lane.b32.xlu0 %v951, 125
          %v1300 = vpop.permute.xlu0 %1299
          %1301 = vrot.lane.b32.xlu0 %v953, 125
          %v1302 = vpop.permute.xlu0 %1301
          %vm1303 = vcmask 1022976
          %v1304 = vsel %vm1303, %v1296, %v1298
          %v1305 = vsel %vm1303, %v1298, %v1300
          %v1306 = vsel %vm1303, %v1300, %v1302
          %v1311 = vsel %vm1303, %v1302, 0.0
          %v1312 = vstv %s1294
          %v1313 = vmul.f32 %v1312, %v1304
          %v1314 = vmul.f32 %v1312, %v1305
          %v1315 = vmul.f32 %v1312, %v1306
          %v1316 = vmul.f32 %v1312, %v1311
          %v1317 = vadd.f32 %v1290, %v1313
          %v1318 = vadd.f32 %v1291, %v1314
          %v1319 = vadd.f32 %v1292, %v1315
          %v1320 = vadd.f32 %v1293, %v1316
          %s1321 = sld [smem:[#allocation11 + $0xd]]
          %1322 = vrot.lane.b32.xlu0 %v989, 125
          %v1323 = vpop.permute.xlu0 %1322
          %1324 = vrot.lane.b32.xlu0 %v997, 125
          %v1325 = vpop.permute.xlu0 %1324
          %1326 = vrot.lane.b32.xlu0 %v996, 125
          %v1327 = vpop.permute.xlu0 %1326
          %1328 = vrot.lane.b32.xlu0 %v998, 125
          %v1329 = vpop.permute.xlu0 %1328
          %v1330 = vsel %vm1303, %v1323, %v1325
          %v1331 = vsel %vm1303, %v1325, %v1327
          %v1332 = vsel %vm1303, %v1327, %v1329
          %v1337 = vsel %vm1303, %v1329, 0.0
          %v1338 = vstv %s1321
          %v1339 = vmul.f32 %v1338, %v1330
          %v1340 = vmul.f32 %v1338, %v1331
          %v1341 = vmul.f32 %v1338, %v1332
          %v1342 = vmul.f32 %v1338, %v1337
          %v1343 = vadd.f32 %v1317, %v1339
          %v1344 = vadd.f32 %v1318, %v1340
          %v1345 = vadd.f32 %v1319, %v1341
          %v1346 = vadd.f32 %v1320, %v1342
          %v1347 = vxor.u32 %v1343, 2147483648
          %v1348 = vxor.u32 %v1344, 2147483648
          %v1349 = vxor.u32 %v1345, 2147483648
          %v1350 = vxor.u32 %v1346, 2147483648
          %v1351 = vmul.f32 %v1347, 1.442695
          %v1352 = vpow.pop %v1351
          %v1353 = vmul.f32 %v1348, 1.442695
          %v1354 = vpow.pop %v1353
          %v1355 = vmul.f32 %v1349, 1.442695
          %v1356 = vpow.pop %v1355
          %v1357 = vmul.f32 %v1350, 1.442695
          %v1358 = vpow.pop %v1357
          %v1359 = vadd.f32 %v1352, 1.0
          %v1360 = vadd.f32 %v1354, 1.0
          %v1361 = vadd.f32 %v1356, 1.0
          %v1362 = vadd.f32 %v1358, 1.0
          %v1363 = vrcp.pop %v1359
          %v1364 = vmul.f32 1.0, %v1363
          %v1365 = vrcp.pop %v1360
          %v1366 = vmul.f32 1.0, %v1365
          %v1367 = vrcp.pop %v1361
          %v1368 = vmul.f32 1.0, %v1367
          %v1369 = vrcp.pop %v1362
          %v1370 = vmul.f32 1.0, %v1369
          %vm1371 = vcmask 1041408
          %v1372 = vsel %vm1371, %v1364, 0.0
          %v1373 = vsel %vm1371, %v1366, 0.0
          %v1374 = vadd.f32 %v1372, %v1373
          %v1375 = vsel %vm1371, %v1368, 0.0
          %v1376 = vadd.f32 %v1374, %v1375
          %v1377 = vsel %vm1371, %v1370, 0.0
          %v1378 = vadd.f32 %v1376, %v1377
          %1379 = vadd.xlane.f32.xlu0 %v1378
          %v1380 = vpop.xlane.xlu0 %1379
          %v1381 = vrot.slane %v1380, 4
          %v1382 = vadd.f32 %v1380, %v1381
          %v1383 = vrot.slane %v1382, 2
          %v1384 = vadd.f32 %v1382, %v1383
          %v1385 = vrot.slane %v1384, 1
          %v1386 = vadd.f32 %v1384, %v1385
          %s1387 = vtos %v1386
          %v1388 = vrcp.pop 1024.0
          %s1389 = vtos %v1388
          %s1390 = smul.f32 %s1387, %s1389
          %v1391 = vstv %s1390
          %vm1392 = vcmask 0
          %1393 = vst.msk [vmem:[#allocation12] sm:$0x1] %vm1392, %v1391
        $region64: #{tpu_custom_call.1} parent=35 // pred_fallthru
          _
        // Predicated region
        $region65: #{tpu_custom_call.1} parent=35 // pred_check
          %p1394 = pneg %p134
        $region66: #{tpu_custom_call.1} parent=35 // pred_check_branch
          %1396 = sbr.rel (%p1394) target = $region68
        $region67: #{tpu_custom_call.1} parent=35 // pred_region
          %s1398 = ssub.s32 16, 16
          %1399 = vsyncadd [#allocation9], %s1398
          %s1401 = sshll.u32 [#allocation12], 4
          %s1402 = int_to_ptr.vmem [resolvable:$true] %s1401
          %1404 = dma.vmem_to_hbm [thread:$0]  %s1402, 16, %s4, [#allocation9]
        $region68: #{tpu_custom_call.1} parent=35 // pred_fallthru
          _
        // Predicated region
        $region69: #{tpu_custom_call.1} parent=35 // pred_check
          %p1405 = pneg %p134
        $region70: #{tpu_custom_call.1} parent=35 // pred_check_branch
          %1407 = sbr.rel (%p1405) target = $region72
        $region71: #{tpu_custom_call.1} parent=35 // pred_region
          %1408 = dma.done [#allocation9], 16
        $region72: #{tpu_custom_call.1} parent=35 // pred_fallthru
          _
      $region36: #{tpu_custom_call.1} parent=5 // pred_fallthru
        _
      %p1409 = scmp.le.s32.totalorder 2, %s15
      // Predicated region
      $region73: #{tpu_custom_call.1} parent=5 // pred_check
        %p1410 = pneg %p1409
      $region74: #{tpu_custom_call.1} parent=5 // pred_check_branch
        %1412 = sbr.rel (%p1410) target = $region76
      $region75: #{tpu_custom_call.1} parent=5 // pred_region
        %s1413 = ssub.s32 %s15, 2
      $region76: #{tpu_custom_call.1} parent=5 // pred_fallthru
        _
    $region6: #{tpu_custom_call.1} parent=1 // loop_footer
      %s19 = sadd.s32 1, %s15
    $region7: #{tpu_custom_call.1} parent=1 // loop_footer_branch
      %14 = sbr.rel target = $region3
    $region8: #{tpu_custom_call.1} parent=1 // loop_exit
      _
    %1414 = vsyncpa [#allocation8], 1
    %s1415 = scalar_lea.sflag [#allocation8], 1
    %1416 = vsyncpa %s1415, 1
    %1417 = vsyncpa [#allocation9], 1
    %s1418 = scalar_lea.sflag [#allocation9], 1
    %1419 = vsyncpa %s1418, 1
    %1420 = vsyncpa [#allocation10], 1
    %s1421 = scalar_lea.sflag [#allocation10], 1
    %1422 = vsyncpa %s1421, 1

</llo_original>
